<compile_context>
chip_gen: v7x
topology: tpu7x:2x2x1
jax: 0.10.0
libtpu: 0.0.40
codegen_flags: <defaults>
</compile_context>

<pallas_src>
import functools

import jax
import jax.numpy as jnp
from jax import lax
from jax.experimental import pallas as pl
from jax.experimental.pallas import tpu as pltpu


_VMEM_LIMIT_BYTES = 64 * 1024 * 1024  # ceiling check only; demo usage is far below this


def _choose_tile(dim, preferred, align):
    """Largest t <= preferred with t % align == 0 and dim % t == 0; else the full dim.

    A full-extent block is always legal w.r.t. the (8, 128) layout rule."""
    if dim <= preferred:
        return dim
    t = (preferred // align) * align
    while t >= align:
        if dim % t == 0:
            return t
        t -= align
    return dim


# ----------------------------------------------------------------------------
# Kernel 1: tiled Linear  y = x @ Wt + b   (PyTorch nn.Linear semantics; Wt is
# the pre-transposed weight, prepared once in prepare_params).
# ----------------------------------------------------------------------------
def _linear_kernel(x_ref, wt_ref, b_ref, o_ref, acc_ref):
    @pl.when(pl.program_id(2) == 0)
    def _init():
        acc_ref[...] = jnp.zeros_like(acc_ref)

    acc_ref[...] += jnp.dot(x_ref[...], wt_ref[...],
                            preferred_element_type=jnp.float32)

    @pl.when(pl.program_id(2) == pl.num_programs(2) - 1)
    def _finalize():
        o_ref[...] = (acc_ref[...] + b_ref[...].astype(jnp.float32)).astype(o_ref.dtype)


def pallas_linear(x, wt, b, *, compute_dtype=None, out_dtype=jnp.float32,
                  tile_m=256, tile_n=256, tile_k=512):
    """x: (M, Din), wt: (Din, Dout) [already transposed], b: (Dout,)."""
    m, din = x.shape
    din2, dout = wt.shape
    assert din == din2, (x.shape, wt.shape)

    if compute_dtype is not None and x.dtype != compute_dtype:
        x = x.astype(compute_dtype)
    if compute_dtype is not None and wt.dtype != compute_dtype:
        wt = wt.astype(compute_dtype)
    b2 = b.reshape(1, dout).astype(jnp.float32)

    tm = _choose_tile(m, tile_m, 8)       # sublane-aligned (mult of 8 or full)
    tn = _choose_tile(dout, tile_n, 128)  # lane-aligned   (mult of 128 or full)
    tk = _choose_tile(din, tile_k, 128)

    grid = (m // tm, dout // tn, din // tk)
    return pl.pallas_call(
        _linear_kernel,
        out_shape=jax.ShapeDtypeStruct((m, dout), out_dtype),
        grid_spec=pltpu.PrefetchScalarGridSpec(
            num_scalar_prefetch=0,
            grid=grid,
            in_specs=[
                pl.BlockSpec((tm, tk), lambda i, j, kk: (i, kk)),
                pl.BlockSpec((tk, tn), lambda i, j, kk: (kk, j)),
                pl.BlockSpec((1, tn), lambda i, j, kk: (0, j)),
            ],
            out_specs=pl.BlockSpec((tm, tn), lambda i, j, kk: (i, j)),
            scratch_shapes=[pltpu.VMEM((tm, tn), jnp.float32)],
        ),
        compiler_params=pltpu.CompilerParams(
            dimension_semantics=("parallel", "parallel", "arbitrary"),
            vmem_limit_bytes=_VMEM_LIMIT_BYTES,
        ),
    )(x, wt, b2)


# ----------------------------------------------------------------------------
# Kernel 2: scaled dot-product attention over all heads of one (batch, q-tile).
# Inputs/outputs stay in (B, S, d_model) layout; heads are sliced inside the
# kernel, so split_heads / merge_heads never touch HBM.
# ----------------------------------------------------------------------------
def _attn_kernel(*refs, num_heads, d_head, scale, has_mask, has_weights):
    q_ref, k_ref, v_ref = refs[0], refs[1], refs[2]
    idx = 3
    mask_ref = None
    if has_mask:
        mask_ref = refs[idx]
        idx += 1
    o_ref = refs[idx]
    idx += 1
    w_ref = refs[idx] if has_weights else None

    q = q_ref[0]   # (tq, D)
    k = k_ref[0]   # (S,  D)
    v = v_ref[0]   # (S,  D)
    neg = None
    if mask_ref is not None:
        neg = mask_ref[0] * jnp.float32(-1e9)   # (tq, S), shared across heads

    head_outs = []
    for h in range(num_heads):             # static unrolled loop (H is small)
        lo = h * d_head
        qh = q[:, lo:lo + d_head]           # (tq, Dh)
        kh = k[:, lo:lo + d_head]           # (S,  Dh)
        vh = v[:, lo:lo + d_head]           # (S,  Dh)

        # scores = qh @ kh^T without an explicit transpose: contract last axes.
        s = lax.dot_general(qh, kh,
                            dimension_numbers=(((1,), (1,)), ((), ())),
                            preferred_element_type=jnp.float32) * scale  # (tq, S)
        if neg is not None:
            s = s + neg

        m = jnp.max(s, axis=-1, keepdims=True)
        e = jnp.exp(s - m)
        denom = jnp.sum(e, axis=-1, keepdims=True)
        p = e * pl.reciprocal(denom, approx=True)   # EUP reciprocal, f32 softmax

        if w_ref is not None:                       # optional O(S^2) weights output
            w_ref[0, h] = p.astype(w_ref.dtype)

        head_outs.append(jnp.dot(p.astype(vh.dtype), vh,
                                 preferred_element_type=jnp.float32))

    # merge_heads folded into the kernel: lane-dense (tq, D) store.
    o_ref[0] = jnp.concatenate(head_outs, axis=-1).astype(o_ref.dtype)


def pallas_attention(q, k, v, num_heads, mask=None, *, return_weights=True,
                     compute_dtype=None, weights_dtype=jnp.float32, q_tile=256):
    """q/k/v: (B, S, D) post-projection activations; mask broadcastable to (B, S, S).

    Returns (output (B, S, D) f32, weights (B, H, S, S) or None)."""
    bsz, seq, d_model = q.shape
    d_head = d_model // num_heads
    if compute_dtype is not None:
        q = q.astype(compute_dtype)
        k = k.astype(compute_dtype)
        v = v.astype(compute_dtype)

    has_mask = mask is not None
    if has_mask:
        mask = jnp.asarray(mask, jnp.float32)
        if mask.ndim == 4:
            if mask.shape[1] != 1:
                # TODO(synk): per-head masks are not supported in the kernel.
                raise NotImplementedError("per-head masks not supported")
            mask = mask[:, 0]
        mask = jnp.broadcast_to(mask, (bsz, seq, seq))

    tq = _choose_tile(seq, q_tile, 8)
    grid = (bsz, seq // tq)

    kernel = functools.partial(_attn_kernel, num_heads=num_heads, d_head=d_head,
                               scale=1.0 / (d_head ** 0.5),
                               has_mask=has_mask, has_weights=return_weights)

    o_shape = jax.ShapeDtypeStruct((bsz, seq, d_model), jnp.float32)
    o_spec = pl.BlockSpec((1, tq, d_model), lambda b, i: (b, i, 0))

    in_specs = [
        pl.BlockSpec((1, tq, d_model), lambda b, i: (b, i, 0)),   # q tile
        pl.BlockSpec((1, seq, d_model), lambda b, i: (b, 0, 0)),  # K (resident per batch)
        pl.BlockSpec((1, seq, d_model), lambda b, i: (b, 0, 0)),  # V (resident per batch)
    ]
    operands = [q, k, v]
    if has_mask:
        in_specs.append(pl.BlockSpec((1, tq, seq), lambda b, i: (b, i, 0)))
        operands.append(mask)

    if return_weights:
        out_shape = (o_shape,
                     jax.ShapeDtypeStruct((bsz, num_heads, seq, seq), weights_dtype))
        out_specs = (o_spec,
                     pl.BlockSpec((1, num_heads, tq, seq), lambda b, i: (b, 0, i, 0)))
    else:
        out_shape = o_shape
        out_specs = o_spec

    result = pl.pallas_call(
        kernel,
        out_shape=out_shape,
        grid_spec=pltpu.PrefetchScalarGridSpec(
            num_scalar_prefetch=0,
            grid=grid,
            in_specs=in_specs,
            out_specs=out_specs,
        ),
        compiler_params=pltpu.CompilerParams(
            dimension_semantics=("parallel", "parallel"),
            vmem_limit_bytes=_VMEM_LIMIT_BYTES,
        ),
    )(*operands)

    if return_weights:
        return result[0], result[1]
    return result, None


# ----------------------------------------------------------------------------
# Full module forward.
# ----------------------------------------------------------------------------
def multi_head_self_attention(q, k, v, params, num_heads, mask=None,
                              return_weights=True, compute_dtype=None):
    """q,k,v: (B, S, d_model) f32; params from prepare_params().

    Returns (out (B, S, d_model), attn_weights (B, H, S, S) or None)."""
    bsz, seq, d_model = q.shape

    def proj(x, wt, b):
        y = pallas_linear(x.reshape(bsz * seq, d_model), wt, b,
                          compute_dtype=compute_dtype)
        return y.reshape(bsz, seq, d_model)

    # NOTE: q/k/v may be distinct tensors (module signature), so the projections
    # cannot be fused into a single (Din, 3*Dout) matmul without copying activations;
    # each call below is itself fully tiled/pipelined.
    qp = proj(q, params["wq_t"], params["wq_b"])
    kp = proj(k, params["wk_t"], params["wk_b"])
    vp = proj(v, params["wv_t"], params["wv_b"])

    attn_out, attn_weights = pallas_attention(
        qp, kp, vp, num_heads, mask=mask,
        return_weights=return_weights, compute_dtype=compute_dtype)

    out = pallas_linear(attn_out.reshape(bsz * seq, d_model),
                        params["dense_t"], params["dense_b"],
                        compute_dtype=compute_dtype)
    return out.reshape(bsz, seq, d_model), attn_weights


# ----------------------------------------------------------------------------
# Parameter helpers (PyTorch nn.Linear layout + one-time preparation).
# ----------------------------------------------------------------------------
def init_params(key, d_model):
    keys = jax.random.split(key, 8)
    scale = 1.0 / jnp.sqrt(jnp.float32(d_model))

    def lin(kw, kb):
        w = jax.random.uniform(kw, (d_model, d_model), jnp.float32, -scale, scale)
        b = jax.random.uniform(kb, (d_model,), jnp.float32, -scale, scale)
        return w, b

    wq_w, wq_b = lin(keys[0], keys[1])
    wk_w, wk_b = lin(keys[2], keys[3])
    wv_w, wv_b = lin(keys[4], keys[5])
    de_w, de_b = lin(keys[6], keys[7])
    return dict(wq_w=wq_w, wq_b=wq_b, wk_w=wk_w, wk_b=wk_b,
                wv_w=wv_w, wv_b=wv_b, dense_w=de_w, dense_b=de_b)


def prepare_params(raw, compute_dtype=None):
    """Transpose PyTorch-layout (Dout, Din) weights ONCE (and optionally pre-cast)."""
    def prep_w(w):
        wt = jnp.transpose(w)
        return wt.astype(compute_dtype) if compute_dtype is not None else wt

    return dict(
        wq_t=prep_w(raw["wq_w"]), wq_b=raw["wq_b"],
        wk_t=prep_w(raw["wk_w"]), wk_b=raw["wk_b"],
        wv_t=prep_w(raw["wv_w"]), wv_b=raw["wv_b"],
        dense_t=prep_w(raw["dense_w"]), dense_b=raw["dense_b"],
    )


# ----------------------------------------------------------------------------
# Pure-JAX reference (mirrors the PyTorch module exactly) for a sanity check.
# ----------------------------------------------------------------------------
def reference_mhsa(q, k, v, raw, num_heads, mask=None):
    bsz, seq, d_model = q.shape
    d_head = d_model // num_heads

    def lin(x, w, b):
        return x @ w.T + b

    def split(x):
        return x.reshape(bsz, seq, num_heads, d_head).transpose(0, 2, 1, 3)

    qs = split(lin(q, raw["wq_w"], raw["wq_b"]))
    ks = split(lin(k, raw["wk_w"], raw["wk_b"]))
    vs = split(lin(v, raw["wv_w"], raw["wv_b"]))

    scores = jnp.einsum("bhqd,bhkd->bhqk", qs, ks) / jnp.sqrt(jnp.float32(d_head))
    if mask is not None:
        scores = scores + jnp.asarray(mask, jnp.float32) * (-1e9)
    weights = jax.nn.softmax(scores, axis=-1)
    out = jnp.einsum("bhqk,bhkd->bhqd", weights, vs)
    merged = out.transpose(0, 2, 1, 3).reshape(bsz, seq, d_model)
    return lin(merged, raw["dense_w"], raw["dense_b"]), weights


if __name__ == "__main__":
    batch, seq, d_model, num_heads = 2, 8, 32, 4

    key = jax.random.PRNGKey(0)
    kp, kq, kk, kv = jax.random.split(key, 4)
    raw_params = init_params(kp, d_model)
    params = prepare_params(raw_params)   # f32 path (bit-matches the PyTorch module);
                                          # pass compute_dtype=jnp.bfloat16 on v6e/v7x.

    q = jax.random.normal(kq, (batch, seq, d_model), jnp.float32)
    k = jax.random.normal(kk, (batch, seq, d_model), jnp.float32)
    v = jax.random.normal(kv, (batch, seq, d_model), jnp.float32)

    fwd = jax.jit(functools.partial(multi_head_self_attention, num_heads=num_heads))
    out, attn = fwd(q, k, v, params)
    jax.block_until_ready(out)
    jax.block_until_ready(attn)

    assert out.shape == (batch, seq, d_model)
    assert attn.shape == (batch, num_heads, seq, seq)

    # Numerical sanity check against the pure-JAX / PyTorch-equivalent math.
    ref_out, ref_attn = reference_mhsa(q, k, v, raw_params, num_heads)
    assert float(jnp.max(jnp.abs(out - ref_out))) < 5e-2
    assert float(jnp.max(jnp.abs(attn - ref_attn))) < 5e-2

    # Fast path: skip the O(S^2) attention-weights writeback entirely.
    fwd_nw = jax.jit(functools.partial(multi_head_self_attention,
                                       num_heads=num_heads, return_weights=False))
    out_nw, attn_nw = fwd_nw(q, k, v, params)
    jax.block_until_ready(out_nw)
    assert attn_nw is None
    assert float(jnp.max(jnp.abs(out_nw - ref_out))) < 5e-2

    # Masked path (mask * -1e9 additive mask, causal example).
    causal = jnp.triu(jnp.ones((seq, seq), jnp.float32), k=1)
    fwd_m = jax.jit(functools.partial(multi_head_self_attention, num_heads=num_heads))
    out_m, attn_m = fwd_m(q, k, v, params, mask=causal)
    jax.block_until_ready(out_m)
    ref_out_m, ref_attn_m = reference_mhsa(q, k, v, raw_params, num_heads, mask=causal)
    assert float(jnp.max(jnp.abs(out_m - ref_out_m))) < 5e-2
    assert float(jnp.max(jnp.abs(attn_m - ref_attn_m))) < 5e-2

    print("KERNEL_OK")
</pallas_src>

<mosaic_0001>
module attributes {stable_mosaic.version = 11 : i64} {
  func.func @_linear_kernel(%arg0: i32, %arg1: i32, %arg2: i32, %arg3: memref<16x32xf32, #tpu.memory_space<vmem>>, %arg4: memref<32x32xf32, #tpu.memory_space<vmem>>, %arg5: memref<1x32xf32, #tpu.memory_space<vmem>>, %arg6: memref<16x32xf32, #tpu.memory_space<vmem>>, %arg7: memref<16x32xf32, #tpu.memory_space<vmem>>) attributes {dimension_semantics = [#tpu.dimension_semantics<parallel>, #tpu.dimension_semantics<parallel>, #tpu.dimension_semantics<arbitrary>], iteration_bounds = array<i64: 1, 1, 1>, scalar_prefetch = 0 : i64, scratch_operands = 1 : i64, tpu.core_type = #tpu.core_type<tc>, window_params = [{transform_indices = @transform_0, window_bounds = array<i64: 16, 32>}, {transform_indices = @transform_1, window_bounds = array<i64: 32, 32>}, {transform_indices = @transform_2, window_bounds = array<i64: 1, 32>}, {transform_indices = @transform_3, window_bounds = array<i64: 16, 32>}]} {
    %c0_i32 = arith.constant 0 : i32
    %0 = arith.cmpi eq, %arg2, %c0_i32 : i32
    %1 = arith.extui %0 : i1 to i32
    %c0_i32_0 = arith.constant 0 : i32
    %2 = arith.cmpi ne, %1, %c0_i32_0 : i32
    scf.if %2 {
      %cst_10 = arith.constant 0.000000e+00 : f32
      %12 = vector.broadcast %cst_10 : f32 to vector<16x32xf32>
      %c0_11 = arith.constant 0 : index
      %c0_12 = arith.constant 0 : index
      %13 = vector.load %arg7[%c0_11, %c0_12] : memref<16x32xf32, #tpu.memory_space<vmem>>, vector<16x32xf32>
      tpu.vector_store %arg7[%c0_11, %c0_12], %12 {strides = array<i32>} : memref<16x32xf32, #tpu.memory_space<vmem>>, vector<16x32xf32>,
    } else {
    }
    %c0 = arith.constant 0 : index
    %c0_1 = arith.constant 0 : index
    %3 = vector.load %arg7[%c0, %c0_1] : memref<16x32xf32, #tpu.memory_space<vmem>>, vector<16x32xf32>
    %c0_2 = arith.constant 0 : index
    %c0_3 = arith.constant 0 : index
    %4 = vector.load %arg3[%c0_2, %c0_3] : memref<16x32xf32, #tpu.memory_space<vmem>>, vector<16x32xf32>
    %c0_4 = arith.constant 0 : index
    %c0_5 = arith.constant 0 : index
    %5 = vector.load %arg4[%c0_4, %c0_5] : memref<32x32xf32, #tpu.memory_space<vmem>>, vector<32x32xf32>
    %cst = arith.constant dense<0.000000e+00> : vector<16x32xf32>
    %6 = tpu.matmul %4, %5, %cst {dimension_numbers = #tpu.dot_dimension_numbers<[1], [0], [0], [1], [0, 0, 1, 1], [], []>} : vector<16x32xf32>, vector<32x32xf32>, vector<16x32xf32> -> vector<16x32xf32>
    %7 = arith.addf %3, %6 : vector<16x32xf32>
    %c0_6 = arith.constant 0 : index
    %c0_7 = arith.constant 0 : index
    %8 = vector.load %arg7[%c0_6, %c0_7] : memref<16x32xf32, #tpu.memory_space<vmem>>, vector<16x32xf32>
    tpu.vector_store %arg7[%c0_6, %c0_7], %7 {strides = array<i32>} : memref<16x32xf32, #tpu.memory_space<vmem>>, vector<16x32xf32>,
    %c0_i32_8 = arith.constant 0 : i32
    %9 = arith.cmpi eq, %arg2, %c0_i32_8 : i32
    %10 = arith.extui %9 : i1 to i32
    %c0_i32_9 = arith.constant 0 : i32
    %11 = arith.cmpi ne, %10, %c0_i32_9 : i32
    scf.if %11 {
      %c0_10 = arith.constant 0 : index
      %c0_11 = arith.constant 0 : index
      %12 = vector.load %arg7[%c0_10, %c0_11] : memref<16x32xf32, #tpu.memory_space<vmem>>, vector<16x32xf32>
      %c0_12 = arith.constant 0 : index
      %c0_13 = arith.constant 0 : index
      %13 = vector.load %arg5[%c0_12, %c0_13] : memref<1x32xf32, #tpu.memory_space<vmem>>, vector<1x32xf32>
      %14 = vector.broadcast %13 : vector<1x32xf32> to vector<16x32xf32>
      %15 = arith.addf %12, %14 : vector<16x32xf32>
      %c0_14 = arith.constant 0 : index
      %c0_15 = arith.constant 0 : index
      %16 = vector.load %arg6[%c0_14, %c0_15] : memref<16x32xf32, #tpu.memory_space<vmem>>, vector<16x32xf32>
      tpu.vector_store %arg6[%c0_14, %c0_15], %15 {strides = array<i32>} : memref<16x32xf32, #tpu.memory_space<vmem>>, vector<16x32xf32>,
    } else {
    }
    return
  }
  func.func @transform_0(%arg0: i32, %arg1: i32, %arg2: i32) -> (i32, i32) {
    %c0_i32 = arith.constant 0 : i32
    return %arg0, %arg2 : i32, i32
  }
  func.func @transform_1(%arg0: i32, %arg1: i32, %arg2: i32) -> (i32, i32) {
    %c0_i32 = arith.constant 0 : i32
    return %arg2, %arg1 : i32, i32
  }
  func.func @transform_2(%arg0: i32, %arg1: i32, %arg2: i32) -> (i32, i32) {
    %c0_i32 = arith.constant 0 : i32
    %c0_i32_0 = arith.constant 0 : i32
    return %c0_i32, %arg1 : i32, i32
  }
  func.func @transform_3(%arg0: i32, %arg1: i32, %arg2: i32) -> (i32, i32) {
    %c0_i32 = arith.constant 0 : i32
    return %arg0, %arg1 : i32, i32
  }
}

module attributes {stable_mosaic.version = 11 : i64} {
  func.func @_attn_kernel(%arg0: i32, %arg1: i32, %arg2: memref<1x8x32xf32, #tpu.memory_space<vmem>>, %arg3: memref<1x8x32xf32, #tpu.memory_space<vmem>>, %arg4: memref<1x8x32xf32, #tpu.memory_space<vmem>>, %arg5: memref<1x8x32xf32, #tpu.memory_space<vmem>>, %arg6: memref<1x4x8x8xf32, #tpu.memory_space<vmem>>) attributes {dimension_semantics = [#tpu.dimension_semantics<parallel>, #tpu.dimension_semantics<parallel>], iteration_bounds = array<i64: 2, 1>, scalar_prefetch = 0 : i64, scratch_operands = 0 : i64, tpu.core_type = #tpu.core_type<tc>, window_params = [{transform_indices = @transform_0, window_bounds = array<i64: 1, 8, 32>}, {transform_indices = @transform_1, window_bounds = array<i64: 1, 8, 32>}, {transform_indices = @transform_2, window_bounds = array<i64: 1, 8, 32>}, {transform_indices = @transform_3, window_bounds = array<i64: 1, 8, 32>}, {transform_indices = @transform_4, window_bounds = array<i64: 1, 4, 8, 8>}]} {
    %c0 = arith.constant 0 : index
    %c0_0 = arith.constant 0 : index
    %c0_1 = arith.constant 0 : index
    %0 = vector.load %arg2[%c0, %c0_0, %c0_1] : memref<1x8x32xf32, #tpu.memory_space<vmem>>, vector<1x8x32xf32>
    %1 = vector.shape_cast %0 : vector<1x8x32xf32> to vector<8x32xf32>
    %c0_2 = arith.constant 0 : index
    %c0_3 = arith.constant 0 : index
    %c0_4 = arith.constant 0 : index
    %2 = vector.load %arg3[%c0_2, %c0_3, %c0_4] : memref<1x8x32xf32, #tpu.memory_space<vmem>>, vector<1x8x32xf32>
    %3 = vector.shape_cast %2 : vector<1x8x32xf32> to vector<8x32xf32>
    %c0_5 = arith.constant 0 : index
    %c0_6 = arith.constant 0 : index
    %c0_7 = arith.constant 0 : index
    %4 = vector.load %arg4[%c0_5, %c0_6, %c0_7] : memref<1x8x32xf32, #tpu.memory_space<vmem>>, vector<1x8x32xf32>
    %5 = vector.shape_cast %4 : vector<1x8x32xf32> to vector<8x32xf32>
    %6 = vector.extract_strided_slice %1 {offsets = [0, 0], sizes = [8, 8], strides = [1, 1]} : vector<8x32xf32> to vector<8x8xf32>
    %7 = vector.extract_strided_slice %3 {offsets = [0, 0], sizes = [8, 8], strides = [1, 1]} : vector<8x32xf32> to vector<8x8xf32>
    %8 = vector.extract_strided_slice %5 {offsets = [0, 0], sizes = [8, 8], strides = [1, 1]} : vector<8x32xf32> to vector<8x8xf32>
    %cst = arith.constant dense<0.000000e+00> : vector<8x8xf32>
    %9 = tpu.matmul %6, %7, %cst {dimension_numbers = #tpu.dot_dimension_numbers<[1], [1], [0], [0], [0, 0, 1, 0], [], []>} : vector<8x8xf32>, vector<8x8xf32>, vector<8x8xf32> -> vector<8x8xf32>
    %cst_8 = arith.constant 0.353553385 : f32
    %10 = vector.broadcast %cst_8 : f32 to vector<8x8xf32>
    %11 = arith.mulf %9, %10 : vector<8x8xf32>
    %cst_9 = arith.constant dense<0xFF800000> : vector<8xf32>
    %12 = vector.multi_reduction <maximumf>, %11, %cst_9 [1] : vector<8x8xf32> to vector<8xf32>
    %13 = vector.shape_cast %12 : vector<8xf32> to vector<8x1xf32>
    %14 = vector.broadcast %13 : vector<8x1xf32> to vector<8x8xf32>
    %15 = arith.subf %11, %14 : vector<8x8xf32>
    %16 = math.exp %15 : vector<8x8xf32>
    %cst_10 = arith.constant dense<0.000000e+00> : vector<8xf32>
    %17 = vector.multi_reduction <add>, %16, %cst_10 [1] : vector<8x8xf32> to vector<8xf32>
    %18 = vector.shape_cast %17 : vector<8xf32> to vector<8x1xf32>
    %19 = tpu.reciprocal %18 {approx = true} : vector<8x1xf32> -> vector<8x1xf32>
    %20 = vector.broadcast %19 : vector<8x1xf32> to vector<8x8xf32>
    %21 = arith.mulf %16, %20 : vector<8x8xf32>
    %c0_11 = arith.constant 0 : index
    %c0_12 = arith.constant 0 : index
    %c0_13 = arith.constant 0 : index
    %c0_14 = arith.constant 0 : index
    %22 = vector.load %arg6[%c0_11, %c0_12, %c0_13, %c0_14] : memref<1x4x8x8xf32, #tpu.memory_space<vmem>>, vector<1x1x8x8xf32>
    %23 = vector.shape_cast %22 : vector<1x1x8x8xf32> to vector<8x8xf32>
    %24 = vector.shape_cast %21 : vector<8x8xf32> to vector<1x1x8x8xf32>
    tpu.vector_store %arg6[%c0_11, %c0_12, %c0_13, %c0_14], %24 {strides = array<i32>} : memref<1x4x8x8xf32, #tpu.memory_space<vmem>>, vector<1x1x8x8xf32>,
    %cst_15 = arith.constant dense<0.000000e+00> : vector<8x8xf32>
    %25 = tpu.matmul %21, %8, %cst_15 {dimension_numbers = #tpu.dot_dimension_numbers<[1], [0], [0], [1], [0, 0, 1, 1], [], []>} : vector<8x8xf32>, vector<8x8xf32>, vector<8x8xf32> -> vector<8x8xf32>
    %26 = vector.extract_strided_slice %1 {offsets = [0, 8], sizes = [8, 8], strides = [1, 1]} : vector<8x32xf32> to vector<8x8xf32>
    %27 = vector.extract_strided_slice %3 {offsets = [0, 8], sizes = [8, 8], strides = [1, 1]} : vector<8x32xf32> to vector<8x8xf32>
    %28 = vector.extract_strided_slice %5 {offsets = [0, 8], sizes = [8, 8], strides = [1, 1]} : vector<8x32xf32> to vector<8x8xf32>
    %cst_16 = arith.constant dense<0.000000e+00> : vector<8x8xf32>
    %29 = tpu.matmul %26, %27, %cst_16 {dimension_numbers = #tpu.dot_dimension_numbers<[1], [1], [0], [0], [0, 0, 1, 0], [], []>} : vector<8x8xf32>, vector<8x8xf32>, vector<8x8xf32> -> vector<8x8xf32>
    %cst_17 = arith.constant 0.353553385 : f32
    %30 = vector.broadcast %cst_17 : f32 to vector<8x8xf32>
    %31 = arith.mulf %29, %30 : vector<8x8xf32>
    %cst_18 = arith.constant dense<0xFF800000> : vector<8xf32>
    %32 = vector.multi_reduction <maximumf>, %31, %cst_18 [1] : vector<8x8xf32> to vector<8xf32>
    %33 = vector.shape_cast %32 : vector<8xf32> to vector<8x1xf32>
    %34 = vector.broadcast %33 : vector<8x1xf32> to vector<8x8xf32>
    %35 = arith.subf %31, %34 : vector<8x8xf32>
    %36 = math.exp %35 : vector<8x8xf32>
    %cst_19 = arith.constant dense<0.000000e+00> : vector<8xf32>
    %37 = vector.multi_reduction <add>, %36, %cst_19 [1] : vector<8x8xf32> to vector<8xf32>
    %38 = vector.shape_cast %37 : vector<8xf32> to vector<8x1xf32>
    %39 = tpu.reciprocal %38 {approx = true} : vector<8x1xf32> -> vector<8x1xf32>
    %40 = vector.broadcast %39 : vector<8x1xf32> to vector<8x8xf32>
    %41 = arith.mulf %36, %40 : vector<8x8xf32>
    %c0_20 = arith.constant 0 : index
    %c1 = arith.constant 1 : index
    %c0_21 = arith.constant 0 : index
    %c0_22 = arith.constant 0 : index
    %42 = vector.load %arg6[%c0_20, %c1, %c0_21, %c0_22] : memref<1x4x8x8xf32, #tpu.memory_space<vmem>>, vector<1x1x8x8xf32>
    %43 = vector.shape_cast %42 : vector<1x1x8x8xf32> to vector<8x8xf32>
    %44 = vector.shape_cast %41 : vector<8x8xf32> to vector<1x1x8x8xf32>
    tpu.vector_store %arg6[%c0_20, %c1, %c0_21, %c0_22], %44 {strides = array<i32>} : memref<1x4x8x8xf32, #tpu.memory_space<vmem>>, vector<1x1x8x8xf32>,
    %cst_23 = arith.constant dense<0.000000e+00> : vector<8x8xf32>
    %45 = tpu.matmul %41, %28, %cst_23 {dimension_numbers = #tpu.dot_dimension_numbers<[1], [0], [0], [1], [0, 0, 1, 1], [], []>} : vector<8x8xf32>, vector<8x8xf32>, vector<8x8xf32> -> vector<8x8xf32>
    %46 = vector.extract_strided_slice %1 {offsets = [0, 16], sizes = [8, 8], strides = [1, 1]} : vector<8x32xf32> to vector<8x8xf32>
    %47 = vector.extract_strided_slice %3 {offsets = [0, 16], sizes = [8, 8], strides = [1, 1]} : vector<8x32xf32> to vector<8x8xf32>
    %48 = vector.extract_strided_slice %5 {offsets = [0, 16], sizes = [8, 8], strides = [1, 1]} : vector<8x32xf32> to vector<8x8xf32>
    %cst_24 = arith.constant dense<0.000000e+00> : vector<8x8xf32>
    %49 = tpu.matmul %46, %47, %cst_24 {dimension_numbers = #tpu.dot_dimension_numbers<[1], [1], [0], [0], [0, 0, 1, 0], [], []>} : vector<8x8xf32>, vector<8x8xf32>, vector<8x8xf32> -> vector<8x8xf32>
    %cst_25 = arith.constant 0.353553385 : f32
    %50 = vector.broadcast %cst_25 : f32 to vector<8x8xf32>
    %51 = arith.mulf %49, %50 : vector<8x8xf32>
    %cst_26 = arith.constant dense<0xFF800000> : vector<8xf32>
    %52 = vector.multi_reduction <maximumf>, %51, %cst_26 [1] : vector<8x8xf32> to vector<8xf32>
    %53 = vector.shape_cast %52 : vector<8xf32> to vector<8x1xf32>
    %54 = vector.broadcast %53 : vector<8x1xf32> to vector<8x8xf32>
    %55 = arith.subf %51, %54 : vector<8x8xf32>
    %56 = math.exp %55 : vector<8x8xf32>
    %cst_27 = arith.constant dense<0.000000e+00> : vector<8xf32>
    %57 = vector.multi_reduction <add>, %56, %cst_27 [1] : vector<8x8xf32> to vector<8xf32>
    %58 = vector.shape_cast %57 : vector<8xf32> to vector<8x1xf32>
    %59 = tpu.reciprocal %58 {approx = true} : vector<8x1xf32> -> vector<8x1xf32>
    %60 = vector.broadcast %59 : vector<8x1xf32> to vector<8x8xf32>
    %61 = arith.mulf %56, %60 : vector<8x8xf32>
    %c0_28 = arith.constant 0 : index
    %c2 = arith.constant 2 : index
    %c0_29 = arith.constant 0 : index
    %c0_30 = arith.constant 0 : index
    %62 = vector.load %arg6[%c0_28, %c2, %c0_29, %c0_30] : memref<1x4x8x8xf32, #tpu.memory_space<vmem>>, vector<1x1x8x8xf32>
    %63 = vector.shape_cast %62 : vector<1x1x8x8xf32> to vector<8x8xf32>
    %64 = vector.shape_cast %61 : vector<8x8xf32> to vector<1x1x8x8xf32>
    tpu.vector_store %arg6[%c0_28, %c2, %c0_29, %c0_30], %64 {strides = array<i32>} : memref<1x4x8x8xf32, #tpu.memory_space<vmem>>, vector<1x1x8x8xf32>,
    %cst_31 = arith.constant dense<0.000000e+00> : vector<8x8xf32>
    %65 = tpu.matmul %61, %48, %cst_31 {dimension_numbers = #tpu.dot_dimension_numbers<[1], [0], [0], [1], [0, 0, 1, 1], [], []>} : vector<8x8xf32>, vector<8x8xf32>, vector<8x8xf32> -> vector<8x8xf32>
    %66 = vector.extract_strided_slice %1 {offsets = [0, 24], sizes = [8, 8], strides = [1, 1]} : vector<8x32xf32> to vector<8x8xf32>
    %67 = vector.extract_strided_slice %3 {offsets = [0, 24], sizes = [8, 8], strides = [1, 1]} : vector<8x32xf32> to vector<8x8xf32>
    %68 = vector.extract_strided_slice %5 {offsets = [0, 24], sizes = [8, 8], strides = [1, 1]} : vector<8x32xf32> to vector<8x8xf32>
    %cst_32 = arith.constant dense<0.000000e+00> : vector<8x8xf32>
    %69 = tpu.matmul %66, %67, %cst_32 {dimension_numbers = #tpu.dot_dimension_numbers<[1], [1], [0], [0], [0, 0, 1, 0], [], []>} : vector<8x8xf32>, vector<8x8xf32>, vector<8x8xf32> -> vector<8x8xf32>
    %cst_33 = arith.constant 0.353553385 : f32
    %70 = vector.broadcast %cst_33 : f32 to vector<8x8xf32>
    %71 = arith.mulf %69, %70 : vector<8x8xf32>
    %cst_34 = arith.constant dense<0xFF800000> : vector<8xf32>
    %72 = vector.multi_reduction <maximumf>, %71, %cst_34 [1] : vector<8x8xf32> to vector<8xf32>
    %73 = vector.shape_cast %72 : vector<8xf32> to vector<8x1xf32>
    %74 = vector.broadcast %73 : vector<8x1xf32> to vector<8x8xf32>
    %75 = arith.subf %71, %74 : vector<8x8xf32>
    %76 = math.exp %75 : vector<8x8xf32>
    %cst_35 = arith.constant dense<0.000000e+00> : vector<8xf32>
    %77 = vector.multi_reduction <add>, %76, %cst_35 [1] : vector<8x8xf32> to vector<8xf32>
    %78 = vector.shape_cast %77 : vector<8xf32> to vector<8x1xf32>
    %79 = tpu.reciprocal %78 {approx = true} : vector<8x1xf32> -> vector<8x1xf32>
    %80 = vector.broadcast %79 : vector<8x1xf32> to vector<8x8xf32>
    %81 = arith.mulf %76, %80 : vector<8x8xf32>
    %c0_36 = arith.constant 0 : index
    %c3 = arith.constant 3 : index
    %c0_37 = arith.constant 0 : index
    %c0_38 = arith.constant 0 : index
    %82 = vector.load %arg6[%c0_36, %c3, %c0_37, %c0_38] : memref<1x4x8x8xf32, #tpu.memory_space<vmem>>, vector<1x1x8x8xf32>
    %83 = vector.shape_cast %82 : vector<1x1x8x8xf32> to vector<8x8xf32>
    %84 = vector.shape_cast %81 : vector<8x8xf32> to vector<1x1x8x8xf32>
    tpu.vector_store %arg6[%c0_36, %c3, %c0_37, %c0_38], %84 {strides = array<i32>} : memref<1x4x8x8xf32, #tpu.memory_space<vmem>>, vector<1x1x8x8xf32>,
    %cst_39 = arith.constant dense<0.000000e+00> : vector<8x8xf32>
    %85 = tpu.matmul %81, %68, %cst_39 {dimension_numbers = #tpu.dot_dimension_numbers<[1], [0], [0], [1], [0, 0, 1, 1], [], []>} : vector<8x8xf32>, vector<8x8xf32>, vector<8x8xf32> -> vector<8x8xf32>
    %86 = tpu.concatenate %25, %45, %65, %85 in 1 : vector<8x8xf32>, vector<8x8xf32>, vector<8x8xf32>, vector<8x8xf32> -> vector<8x32xf32>
    %c0_40 = arith.constant 0 : index
    %c0_41 = arith.constant 0 : index
    %c0_42 = arith.constant 0 : index
    %87 = vector.load %arg5[%c0_40, %c0_41, %c0_42] : memref<1x8x32xf32, #tpu.memory_space<vmem>>, vector<1x8x32xf32>
    %88 = vector.shape_cast %87 : vector<1x8x32xf32> to vector<8x32xf32>
    %89 = vector.shape_cast %86 : vector<8x32xf32> to vector<1x8x32xf32>
    tpu.vector_store %arg5[%c0_40, %c0_41, %c0_42], %89 {strides = array<i32>} : memref<1x8x32xf32, #tpu.memory_space<vmem>>, vector<1x8x32xf32>,
    return
  }
  func.func @transform_0(%arg0: i32, %arg1: i32) -> (i32, i32, i32) {
    %c0_i32 = arith.constant 0 : i32
    %c0_i32_0 = arith.constant 0 : i32
    return %arg0, %arg1, %c0_i32 : i32, i32, i32
  }
  func.func @transform_1(%arg0: i32, %arg1: i32) -> (i32, i32, i32) {
    %c0_i32 = arith.constant 0 : i32
    %c0_i32_0 = arith.constant 0 : i32
    %c0_i32_1 = arith.constant 0 : i32
    return %arg0, %c0_i32, %c0_i32_0 : i32, i32, i32
  }
  func.func @transform_2(%arg0: i32, %arg1: i32) -> (i32, i32, i32) {
    %c0_i32 = arith.constant 0 : i32
    %c0_i32_0 = arith.constant 0 : i32
    %c0_i32_1 = arith.constant 0 : i32
    return %arg0, %c0_i32, %c0_i32_0 : i32, i32, i32
  }
  func.func @transform_3(%arg0: i32, %arg1: i32) -> (i32, i32, i32) {
    %c0_i32 = arith.constant 0 : i32
    %c0_i32_0 = arith.constant 0 : i32
    return %arg0, %arg1, %c0_i32 : i32, i32, i32
  }
  func.func @transform_4(%arg0: i32, %arg1: i32) -> (i32, i32, i32, i32) {
    %c0_i32 = arith.constant 0 : i32
    %c0_i32_0 = arith.constant 0 : i32
    %c0_i32_1 = arith.constant 0 : i32
    return %arg0, %c0_i32, %arg1, %c0_i32_0 : i32, i32, i32, i32
  }
}

</mosaic_0001>

<llo_original>
// kernel: multi_head_self_attention.5
$region0: #{multi_head_self_attention.5}
  #allocation0 [shape = 'u32[]', space=smem, size = 0x4, offset = 0x4, fixed_abs, tag = 'smem constant byte address 0x4 - core index']
  #allocation1 [shape = 'u32[144,128]{1,0:T(1,128)}', space=vmem, size = 0x12000, scoped, tag = 'internal scratch']
  #allocation2 [shape = 'f32[16,32]{1,0:T(8,128)}', space=vmem, size = 0x2000, scoped, tag = 'scratch operand']
  %s0 = inlined_call_operand.hbm [shape: f32[16,32], index: 0, kind: input, shape index: {}]
  %s1 = inlined_call_operand.hbm [shape: f32[32,32], index: 1, kind: input, shape index: {}]
  %s2 = inlined_call_operand.hbm [shape: f32[1,32], index: 2, kind: input, shape index: {}]
  %s3 = inlined_call_operand.hbm [shape: f32[16,32], index: 3, kind: output, shape index: {}]
  %s4 = sld [smem:[#allocation0]]
  $region42: #{multi_head_self_attention.5} parent=0
    _
  %s6 = ssub.s32 1, %s4
  %s7 = scalar_select 0, %s6, %s4
  $region1: #{multi_head_self_attention.5} parent=0
    #allocation3 [shape = 'u8[8192]{0}', space=vmem, size = 0x2000, scoped, tag = 'input window, operand 0, single buffered']
    #allocation4 [shape = 's32[1]{0}', space=sflag, size = 0x4, scoped, tag = 'scoped memory for multi_head_self_attention.5']
    #allocation5 [shape = 's32[1]{0}', space=sflag, size = 0x4, scoped, tag = 'scoped memory for multi_head_self_attention.5']
    #allocation6 [shape = 'u8[16384]{0}', space=vmem, size = 0x4000, scoped, tag = 'input window, operand 1, single buffered']
    #allocation7 [shape = 's32[1]{0}', space=sflag, size = 0x4, scoped, tag = 'scoped memory for multi_head_self_attention.5']
    #allocation8 [shape = 'u8[512]{0}', space=vmem, size = 0x400, scoped, tag = 'input window, operand 2, single buffered']
    #allocation9 [shape = 'u8[8192]{0}', space=vmem, size = 0x2000, scoped, tag = 'output window, operand 0, single buffered']
    %8 = vsyncpa [#allocation4], 0
    %9 = vsyncpa [#allocation7], 0
    %10 = vsyncpa [#allocation5], 0
    // Predicated region
    $region2: #{multi_head_self_attention.5} parent=1 // pred_check
      _
    $region3: #{multi_head_self_attention.5} parent=1 // pred_check_branch
      %12 = sbr.rel (0) target = $region5
    $region4: #{multi_head_self_attention.5} parent=1 // pred_region
      %s14 = ssub.s32 256, 256
      %15 = vsyncadd [#allocation4], %s14
      %s16 = sshll.u32 [#allocation3], 4
      %s17 = int_to_ptr.vmem [resolvable:$true] %s16
      %22 = dma.hbm_to_vmem [thread:$0]  %s0, 256, %s17, [#allocation4], 128, 128, 8
    $region5: #{multi_head_self_attention.5} parent=1 // pred_fallthru
      _
    // Predicated region
    $region6: #{multi_head_self_attention.5} parent=1 // pred_check
      _
    $region7: #{multi_head_self_attention.5} parent=1 // pred_check_branch
      %24 = sbr.rel (0) target = $region9
    $region8: #{multi_head_self_attention.5} parent=1 // pred_region
      %s26 = ssub.s32 512, 512
      %27 = vsyncadd [#allocation7], %s26
      %s28 = sshll.u32 [#allocation6], 4
      %s29 = int_to_ptr.vmem [resolvable:$true] %s28
      %34 = dma.hbm_to_vmem [thread:$0]  %s1, 512, %s29, [#allocation7], 128, 128, 8
    $region9: #{multi_head_self_attention.5} parent=1 // pred_fallthru
      _
    // Predicated region
    $region10: #{multi_head_self_attention.5} parent=1 // pred_check
      _
    $region11: #{multi_head_self_attention.5} parent=1 // pred_check_branch
      %36 = sbr.rel (0) target = $region13
    $region12: #{multi_head_self_attention.5} parent=1 // pred_region
      %s38 = ssub.s32 16, 16
      %39 = vsyncadd [#allocation7], %s38
      %s41 = sshll.u32 [#allocation8], 4
      %s42 = int_to_ptr.vmem [resolvable:$true] %s41
      %44 = dma.hbm_to_vmem [thread:$0]  %s2, 16, %s42, [#allocation7]
    $region13: #{multi_head_self_attention.5} parent=1 // pred_fallthru
      _
    // Predicated region
    $region14: #{multi_head_self_attention.5} parent=1 // pred_check
      _
    $region15: #{multi_head_self_attention.5} parent=1 // pred_check_branch
      %46 = sbr.rel (0) target = $region17
    $region16: #{multi_head_self_attention.5} parent=1 // pred_region
      %47 = dma.done [#allocation4], 256
    $region17: #{multi_head_self_attention.5} parent=1 // pred_fallthru
      _
    // Predicated region
    $region18: #{multi_head_self_attention.5} parent=1 // pred_check
      _
    $region19: #{multi_head_self_attention.5} parent=1 // pred_check_branch
      %49 = sbr.rel (0) target = $region21
    $region20: #{multi_head_self_attention.5} parent=1 // pred_region
      %50 = dma.done [#allocation7], 512
    $region21: #{multi_head_self_attention.5} parent=1 // pred_fallthru
      _
    // Predicated region
    $region22: #{multi_head_self_attention.5} parent=1 // pred_check
      _
    $region23: #{multi_head_self_attention.5} parent=1 // pred_check_branch
      %52 = sbr.rel (0) target = $region25
    $region24: #{multi_head_self_attention.5} parent=1 // pred_region
      %53 = dma.done [#allocation7], 16
    $region25: #{multi_head_self_attention.5} parent=1 // pred_fallthru
      _
    %p54 = scmp.eq.s32.totalorder 0, 0
    // Predicated region
    $region26: #{multi_head_self_attention.5} parent=1 // pred_check
      %p55 = pneg %p54
    $region27: #{multi_head_self_attention.5} parent=1 // pred_check_branch
      %57 = sbr.rel (%p55) target = $region29
    $region28: #{multi_head_self_attention.5} parent=1 // pred_region
      %vm58 = vcmask 261120
      %59 = vst.msk [vmem:[#allocation2] sm:$0xff] %vm58, 0.0
      %60 = vst.msk [vmem:[#allocation2 + $0x8] sm:$0xff] %vm58, 0.0
    $region29: #{multi_head_self_attention.5} parent=1 // pred_fallthru
      _
    %v61 = vld [vmem:[#allocation2] sm:$0xff]
    %v62 = vld [vmem:[#allocation2 + $0x8] sm:$0xff]
    %v63 = vld [vmem:[#allocation3] sm:$0xff]
    %v64 = vld [vmem:[#allocation3 + $0x8] sm:$0xff]
    %v65 = vld [vmem:[#allocation6] sm:$0xff]
    %v66 = vld [vmem:[#allocation6 + $0x8] sm:$0xff]
    %v67 = vld [vmem:[#allocation6 + $0x10] sm:$0xff]
    %v68 = vld [vmem:[#allocation6 + $0x18] sm:$0xff]
    %vm69 = vcmask 261120
    %v71 = vsel %vm69, %v63, 0
    %v74 = vsel %vm69, %v64, 0
    %76 = vmatprep.subr.mxu0 0.0
    %77 = vmatpush1.msra.mxu0 %v65
    %78 = vmatprep.subr.mxu0 0.0
    %79 = vmatpush1.msra.mxu0 %v66
    %80 = vmatprep.subr.mxu0 0.0
    %81 = vmatpush1.msra.mxu0 %v67
    %82 = vmatprep.subr.mxu0 0.0
    %83 = vmatpush1.msra.mxu0 %v68
    %84 = vmatprep.subr.mxu0 0.0
    %85 = vmatpush1.msra.mxu0 0.0
    %86 = vmatprep.subr.mxu0 0.0
    %87 = vmatpush1.msra.mxu0 0.0
    %88 = vmatprep.subr.mxu0 0.0
    %89 = vmatpush1.msra.mxu0 0.0
    %90 = vmatprep.subr.mxu0 0.0
    %91 = vmatpush1.msra.mxu0 0.0
    %92 = vmatprep.subr.mxu0 0.0
    %93 = vmatpush1.msra.mxu0 0.0
    %94 = vmatprep.subr.mxu0 0.0
    %95 = vmatpush1.msra.mxu0 0.0
    %96 = vmatprep.subr.mxu0 0.0
    %97 = vmatpush1.msra.mxu0 0.0
    %98 = vmatprep.subr.mxu0 0.0
    %99 = vmatpush1.msra.mxu0 0.0
    %100 = vmatprep.subr.mxu0 0.0
    %101 = vmatpush1.msra.mxu0 0.0
    %102 = vmatprep.subr.mxu0 0.0
    %103 = vmatpush1.msra.mxu0 0.0
    %104 = vmatprep.subr.mxu0 0.0
    %105 = vmatpush1.msra.mxu0 0.0
    %106 = vmatprep.subr.mxu0 0.0
    %107 = vmatpush1.msra.mxu0 0.0
    %108 = vmatprep.subr.mxu0 0.0
    %109 = vmatpush1.msra.mxu0 0.0
    %110 = vmatprep.subr.mxu0 0.0
    %111 = vmatpush1.msra.mxu0 0.0
    %112 = vmatprep.subr.mxu0 0.0
    %113 = vmatpush1.msra.mxu0 0.0
    %114 = vmatprep.subr.mxu0 0.0
    %115 = vmatpush1.msra.mxu0 0.0
    %116 = vmatprep.subr.mxu0 0.0
    %117 = vmatpush1.msra.mxu0 0.0
    %118 = vmatprep.subr.mxu0 0.0
    %119 = vmatpush1.msra.mxu0 0.0
    %120 = vmatprep.subr.mxu0 0.0
    %121 = vmatpush1.msra.mxu0 0.0
    %122 = vmatprep.subr.mxu0 0.0
    %123 = vmatpush1.msra.mxu0 0.0
    %124 = vmatprep.subr.mxu0 0.0
    %125 = vmatpush1.msra.mxu0 0.0
    %126 = vmatprep.subr.mxu0 0.0
    %127 = vmatpush1.msra.mxu0 0.0
    %128 = vmatprep.subr.mxu0 0.0
    %129 = vmatpush1.msra.mxu0 0.0
    %130 = vmatprep.subr.mxu0 0.0
    %131 = vmatpush1.msra.mxu0 0.0
    %132 = vmatprep.subr.mxu0 0.0
    %133 = vmatpush1.msra.mxu0 0.0
    %134 = vmatprep.subr.mxu0 0.0
    %135 = vmatpush1.msra.mxu0 0.0
    %136 = vmatprep.subr.mxu0 0.0
    %137 = vmatpush1.msra.mxu0 0.0
    %138 = vmatprep.subr.mxu0 0.0
    %139 = vmatpush1.msra.mxu0 0.0
    %140 = vmatprep.mubr.f32.mxu0 0.0
    %141 = vmatmul.mubr.f32.gmra.mrb[0].mxu0 %v71
    %v142 = vpop.f32.mrb[0].mxu0
    %v143 = vadd.f32 0.0, %v142
    %v144 = vpop.f32.mrb[0].mxu0
    %145 = vmatprep.mubr.f32.mxu0 0.0
    %146 = vmatmul.mubr.f32.gmra.mrb[0].mxu0 %v74
    %v147 = vpop.f32.mrb[0].mxu0
    %v148 = vadd.f32 0.0, %v147
    %v149 = vpop.f32.mrb[0].mxu0
    %150 = vdwg.mxu0
    %v151 = vadd.f32 %v61, %v143
    %v152 = vadd.f32 %v62, %v148
    %153 = vst.msk [vmem:[#allocation2] sm:$0xff] %vm69, %v151
    %154 = vst.msk [vmem:[#allocation2 + $0x8] sm:$0xff] %vm69, %v152
    // Predicated region
    $region30: #{multi_head_self_attention.5} parent=1 // pred_check
      %p155 = pneg %p54
    $region31: #{multi_head_self_attention.5} parent=1 // pred_check_branch
      %157 = sbr.rel (%p155) target = $region33
    $region32: #{multi_head_self_attention.5} parent=1 // pred_region
      %v158 = vld [vmem:[#allocation2] sm:$0xff]
      %v159 = vld [vmem:[#allocation2 + $0x8] sm:$0xff]
      %v160 = vld [vmem:[#allocation8] sm:$0x1]
      %v162 = vlaneseq
      %v163 = vshrl.u32 %v162, 7
      %v164 = vsub.s32 0, %v163
      %v165 = vrot.slane %v160, %v164
      %v167 = vadd.f32 %v158, %v165
      %v168 = vadd.f32 %v159, %v165
      %169 = vst.msk [vmem:[#allocation9] sm:$0xff] %vm69, %v167
      %170 = vst.msk [vmem:[#allocation9 + $0x8] sm:$0xff] %vm69, %v168
    $region33: #{multi_head_self_attention.5} parent=1 // pred_fallthru
      _
    // Predicated region
    $region34: #{multi_head_self_attention.5} parent=1 // pred_check
      _
    $region35: #{multi_head_self_attention.5} parent=1 // pred_check_branch
      %172 = sbr.rel (0) target = $region37
    $region36: #{multi_head_self_attention.5} parent=1 // pred_region
      %s174 = ssub.s32 256, 256
      %175 = vsyncadd [#allocation5], %s174
      %s176 = sshll.u32 [#allocation9], 4
      %s177 = int_to_ptr.vmem [resolvable:$true] %s176
      %182 = dma.vmem_to_hbm [thread:$0]  %s177, 256, %s3, [#allocation5], 128, 128, 8
    $region37: #{multi_head_self_attention.5} parent=1 // pred_fallthru
      _
    // Predicated region
    $region38: #{multi_head_self_attention.5} parent=1 // pred_check
      _
    $region39: #{multi_head_self_attention.5} parent=1 // pred_check_branch
      %184 = sbr.rel (0) target = $region41
    $region40: #{multi_head_self_attention.5} parent=1 // pred_region
      %185 = dma.done [#allocation5], 256
    $region41: #{multi_head_self_attention.5} parent=1 // pred_fallthru
      _
    %186 = vsyncpa [#allocation4], 1
    %187 = vsyncpa [#allocation7], 1
    %188 = vsyncpa [#allocation5], 1

// kernel: multi_head_self_attention.8
$region0: #{multi_head_self_attention.8}
  #allocation0 [shape = 'u32[]', space=smem, size = 0x4, offset = 0x4, fixed_abs, tag = 'smem constant byte address 0x4 - core index']
  #allocation1 [shape = 'u32[144,128]{1,0:T(1,128)}', space=vmem, size = 0x12000, scoped, tag = 'internal scratch']
  %s0 = inlined_call_operand.hbm [shape: f32[2,8,32], index: 0, kind: input, shape index: {}]
  %s1 = inlined_call_operand.hbm [shape: f32[2,8,32], index: 1, kind: input, shape index: {}]
  %s2 = inlined_call_operand.hbm [shape: f32[2,8,32], index: 2, kind: input, shape index: {}]
  %s3 = inlined_call_operand.hbm [shape: f32[2,8,32], index: 3, kind: output, shape index: {0}]
  %s4 = inlined_call_operand.hbm [shape: f32[2,4,8,8], index: 4, kind: output, shape index: {1}]
  %5 = xla_tuple %s3, %s4
  %s6 = sld [smem:[#allocation0]]
  $region65: #{multi_head_self_attention.8} parent=0
    _
  %s8 = ssub.s32 1, %s6
  %s9 = scalar_select 0, %s8, %s6
  $region1: #{multi_head_self_attention.8} parent=0
    #allocation2 [shape = 'u8[8192]{0}', space=vmem, size = 0x2000, scoped, tag = 'input window, operand 0']
    #allocation3 [shape = 's32[2]{0}', space=sflag, size = 0x8, scoped, tag = 'scoped memory for multi_head_self_attention.8']
    #allocation4 [shape = 's32[2]{0}', space=sflag, size = 0x8, scoped, tag = 'scoped memory for multi_head_self_attention.8']
    #allocation5 [shape = 'u8[8192]{0}', space=vmem, size = 0x2000, scoped, tag = 'input window, operand 1']
    #allocation6 [shape = 's32[2]{0}', space=sflag, size = 0x8, scoped, tag = 'scoped memory for multi_head_self_attention.8']
    #allocation7 [shape = 'u8[8192]{0}', space=vmem, size = 0x2000, scoped, tag = 'input window, operand 2']
    #allocation8 [shape = 'u8[8192]{0}', space=vmem, size = 0x2000, scoped, tag = 'output window, operand 0']
    #allocation9 [shape = 'u8[32768]{0}', space=vmem, size = 0x8000, scoped, tag = 'output window, operand 1']
    #allocation10 [shape = 's32[2]{0}', space=sflag, size = 0x8, scoped, tag = 'scoped memory for multi_head_self_attention.8']
    %10 = vsyncpa [#allocation3], 0
    %s11 = scalar_lea.sflag [#allocation3], 1
    %12 = vsyncpa %s11, 0
    %13 = vsyncpa [#allocation6], 0
    %s14 = scalar_lea.sflag [#allocation6], 1
    %15 = vsyncpa %s14, 0
    %16 = vsyncpa [#allocation4], 0
    %s17 = scalar_lea.sflag [#allocation4], 1
    %18 = vsyncpa %s17, 0
    %19 = vsyncpa [#allocation10], 0
    %s20 = scalar_lea.sflag [#allocation10], 1
    %21 = vsyncpa %s20, 0
    loop: start=0, step=1, limit=4
    $region2: #{multi_head_self_attention.8} parent=1 // loop_pre_header
      _
    $region3: #{multi_head_self_attention.8} parent=1 // loop_header
      %s23 = sphi 0, %s27
      %p24 = scmp.ge.s32.totalorder %s23, 4
      %s30 = sphi 0, %s42
      %s31 = sphi 0, %s38
      %s32 = sphi 0, %s30
      %s33 = sphi 0, %s31
      %s34 = sphi 0, %s32
      %s35 = sphi 0, %s33
      %s47 = sphi 0, %s49
      %s50 = sphi 0, %s47
      %s51 = sphi 0, %s50
      %s67 = sphi 0, %s51
      %s73 = sphi 0, %s75
      %s76 = sphi 0, %s73
      %s77 = sphi 0, %s76
      %s93 = sphi 0, %s77
      %s99 = sphi 0, %s101
      %s102 = sphi 0, %s99
      %s103 = sphi 0, %s102
      %s119 = sphi 0, %s103
      %s127 = sphi 0, %s129
      %s130 = sphi 0, %s127
      %s131 = sphi 0, %s130
      %s147 = sphi 0, %s131
      %s155 = sphi 0, %s157
      %s158 = sphi 0, %s155
      %s159 = sphi 0, %s158
      %s175 = sphi 0, %s159
    $region4: #{multi_head_self_attention.8} parent=1 // loop_header_branch
      %26 = sbr.rel (%p24) target = $region8
    $region5: #{multi_head_self_attention.8} parent=1 // loop_body
      %s28 = ssub.s32 %s23, 1
      %s29 = ssub.s32 %s23, 2
      %s36 = sadd.s32 1, %s31
      %p37 = scmp.ge.s32.totalorder %s36, 1
      %s38 = scalar_select %p37, 0, %s36
      %s39 = sadd.s32 1, %s30
      %s40 = scalar_select %p37, %s39, %s30
      %p41 = scmp.ge.s32.totalorder %s40, 2
      %s42 = scalar_select %p41, 0, %s40
      %s43 = ssub.s32 %s30, %s42
      %s44 = ssub.s32 %s31, %s38
      %s45 = sor.u32 %s43, %s44
      %p46 = scmp.eq.s32.totalorder %s45, 0
      %s48 = sadd.s32 %s47, 1
      %s49 = scalar_select %p46, %s47, %s48
      %p52 = pneg %p46
      %p53 = scmp.eq.s32.totalorder %s23, 1
      %p54 = por %p52, %p53
      %p55 = scmp.ne.s32.totalorder %s47, %s50
      %p56 = scmp.eq.s32.totalorder %s23, 0
      %p57 = por %p55, %p56
      %p58 = scmp.ne.s32.totalorder %s47, %s50
      %p59 = scmp.eq.s32.totalorder %s28, 1
      %p60 = por %p58, %p59
      %p61 = scmp.ne.s32.totalorder %s50, %s51
      %p62 = scmp.eq.s32.totalorder %s28, 0
      %p63 = por %p61, %p62
      %p64 = scmp.ne.s32.totalorder %s50, %s51
      %p65 = scmp.eq.s32.totalorder %s29, 1
      %p66 = por %p64, %p65
      %p68 = scmp.ne.s32.totalorder %s51, %s67
      %p69 = scmp.eq.s32.totalorder %s29, 0
      %p70 = por %p68, %p69
      %s71 = ssub.s32 %s30, %s42
      %p72 = scmp.eq.s32.totalorder %s71, 0
      %s74 = sadd.s32 %s73, 1
      %s75 = scalar_select %p72, %s73, %s74
      %p78 = pneg %p72
      %p79 = scmp.eq.s32.totalorder %s23, 1
      %p80 = por %p78, %p79
      %p81 = scmp.ne.s32.totalorder %s73, %s76
      %p82 = scmp.eq.s32.totalorder %s23, 0
      %p83 = por %p81, %p82
      %p84 = scmp.ne.s32.totalorder %s73, %s76
      %p85 = scmp.eq.s32.totalorder %s28, 1
      %p86 = por %p84, %p85
      %p87 = scmp.ne.s32.totalorder %s76, %s77
      %p88 = scmp.eq.s32.totalorder %s28, 0
      %p89 = por %p87, %p88
      %p90 = scmp.ne.s32.totalorder %s76, %s77
      %p91 = scmp.eq.s32.totalorder %s29, 1
      %p92 = por %p90, %p91
      %p94 = scmp.ne.s32.totalorder %s77, %s93
      %p95 = scmp.eq.s32.totalorder %s29, 0
      %p96 = por %p94, %p95
      %s97 = ssub.s32 %s30, %s42
      %p98 = scmp.eq.s32.totalorder %s97, 0
      %s100 = sadd.s32 %s99, 1
      %s101 = scalar_select %p98, %s99, %s100
      %p104 = pneg %p98
      %p105 = scmp.eq.s32.totalorder %s23, 1
      %p106 = por %p104, %p105
      %p107 = scmp.ne.s32.totalorder %s99, %s102
      %p108 = scmp.eq.s32.totalorder %s23, 0
      %p109 = por %p107, %p108
      %p110 = scmp.ne.s32.totalorder %s99, %s102
      %p111 = scmp.eq.s32.totalorder %s28, 1
      %p112 = por %p110, %p111
      %p113 = scmp.ne.s32.totalorder %s102, %s103
      %p114 = scmp.eq.s32.totalorder %s28, 0
      %p115 = por %p113, %p114
      %p116 = scmp.ne.s32.totalorder %s102, %s103
      %p117 = scmp.eq.s32.totalorder %s29, 1
      %p118 = por %p116, %p117
      %p120 = scmp.ne.s32.totalorder %s103, %s119
      %p121 = scmp.eq.s32.totalorder %s29, 0
      %p122 = por %p120, %p121
      %s123 = ssub.s32 %s30, %s42
      %s124 = ssub.s32 %s31, %s38
      %s125 = sor.u32 %s123, %s124
      %p126 = scmp.eq.s32.totalorder %s125, 0
      %s128 = sadd.s32 %s127, 1
      %s129 = scalar_select %p126, %s127, %s128
      %p132 = pneg %p126
      %p133 = scmp.eq.s32.totalorder %s23, 1
      %p134 = por %p132, %p133
      %p135 = scmp.ne.s32.totalorder %s127, %s130
      %p136 = scmp.eq.s32.totalorder %s23, 0
      %p137 = por %p135, %p136
      %p138 = scmp.ne.s32.totalorder %s127, %s130
      %p139 = scmp.eq.s32.totalorder %s28, 1
      %p140 = por %p138, %p139
      %p141 = scmp.ne.s32.totalorder %s130, %s131
      %p142 = scmp.eq.s32.totalorder %s28, 0
      %p143 = por %p141, %p142
      %p144 = scmp.ne.s32.totalorder %s130, %s131
      %p145 = scmp.eq.s32.totalorder %s29, 1
      %p146 = por %p144, %p145
      %p148 = scmp.ne.s32.totalorder %s131, %s147
      %p149 = scmp.eq.s32.totalorder %s29, 0
      %p150 = por %p148, %p149
      %s151 = ssub.s32 %s30, %s42
      %s152 = ssub.s32 %s31, %s38
      %s153 = sor.u32 %s151, %s152
      %p154 = scmp.eq.s32.totalorder %s153, 0
      %s156 = sadd.s32 %s155, 1
      %s157 = scalar_select %p154, %s155, %s156
      %p160 = pneg %p154
      %p161 = scmp.eq.s32.totalorder %s23, 1
      %p162 = por %p160, %p161
      %p163 = scmp.ne.s32.totalorder %s155, %s158
      %p164 = scmp.eq.s32.totalorder %s23, 0
      %p165 = por %p163, %p164
      %p166 = scmp.ne.s32.totalorder %s155, %s158
      %p167 = scmp.eq.s32.totalorder %s28, 1
      %p168 = por %p166, %p167
      %p169 = scmp.ne.s32.totalorder %s158, %s159
      %p170 = scmp.eq.s32.totalorder %s28, 0
      %p171 = por %p169, %p170
      %p172 = scmp.ne.s32.totalorder %s158, %s159
      %p173 = scmp.eq.s32.totalorder %s29, 1
      %p174 = por %p172, %p173
      %p176 = scmp.ne.s32.totalorder %s159, %s175
      %p177 = scmp.eq.s32.totalorder %s29, 0
      %p178 = por %p176, %p177
      %p179 = scmp.le.s32.totalorder 1, %s23
      %p180 = scmp.lt.s32.totalorder %s23, 3
      %p181 = pnand %p179, %p180
      %p182 = pneg %p181
      // Predicated region
      $region9: #{multi_head_self_attention.8} parent=5 // pred_check
        _
      $region10: #{multi_head_self_attention.8} parent=5 // pred_check_branch
        %184 = sbr.rel (%p181) target = $region12
      $region11: #{multi_head_self_attention.8} parent=5 // pred_region
        %s185 = ssub.s32 %s23, 1
      $region12: #{multi_head_self_attention.8} parent=5 // pred_fallthru
        _
      %p186 = scmp.lt.s32.totalorder %s23, 2
      // Predicated region
      $region13: #{multi_head_self_attention.8} parent=5 // pred_check
        %p187 = pneg %p186
      $region14: #{multi_head_self_attention.8} parent=5 // pred_check_branch
        %189 = sbr.rel (%p187) target = $region16
      $region15: #{multi_head_self_attention.8} parent=5 // pred_region
        // Predicated region
        $region17: #{multi_head_self_attention.8} parent=15 // pred_check
          %p190 = pneg %p57
        $region18: #{multi_head_self_attention.8} parent=15 // pred_check_branch
          %192 = sbr.rel (%p190) target = $region20
        $region19: #{multi_head_self_attention.8} parent=15 // pred_region
          %s193 = sand.u32 %s47, 1
          %s194 = scalar_lea.sflag [#allocation3], %s193
          %s195 = sand.u32 %s47, 1
          %s196 = smul.addr %s195, 8
          %s197 = scalar_lea.vmem [#allocation2], %s196
          %s199 = ssub.s32 128, 128
          %200 = vsyncadd %s194, %s199
          %s201 = sadd.s32 %s31, %s30
          %s202 = smul.addr %s201, 128
          %s203 = scalar_lea.hbm %s0, %s202
          %s205 = sshll.u32 %s197, 4
          %s206 = int_to_ptr.vmem [resolvable:$true] %s205
          %208 = dma.hbm_to_vmem [thread:$0]  %s203, 128, %s206, %s194
        $region20: #{multi_head_self_attention.8} parent=15 // pred_fallthru
          _
        // Predicated region
        $region21: #{multi_head_self_attention.8} parent=15 // pred_check
          %p209 = pneg %p83
        $region22: #{multi_head_self_attention.8} parent=15 // pred_check_branch
          %211 = sbr.rel (%p209) target = $region24
        $region23: #{multi_head_self_attention.8} parent=15 // pred_region
          %s212 = sand.u32 %s23, 1
          %s213 = scalar_lea.sflag [#allocation6], %s212
          %s214 = sand.u32 %s73, 1
          %s215 = smul.addr %s214, 8
          %s216 = scalar_lea.vmem [#allocation5], %s215
          %s218 = ssub.s32 128, 128
          %219 = vsyncadd %s213, %s218
          %s220 = smul.addr %s30, 128
          %s221 = scalar_lea.hbm %s1, %s220
          %s223 = sshll.u32 %s216, 4
          %s224 = int_to_ptr.vmem [resolvable:$true] %s223
          %226 = dma.hbm_to_vmem [thread:$0]  %s221, 128, %s224, %s213
        $region24: #{multi_head_self_attention.8} parent=15 // pred_fallthru
          _
        // Predicated region
        $region25: #{multi_head_self_attention.8} parent=15 // pred_check
          %p227 = pneg %p109
        $region26: #{multi_head_self_attention.8} parent=15 // pred_check_branch
          %229 = sbr.rel (%p227) target = $region28
        $region27: #{multi_head_self_attention.8} parent=15 // pred_region
          %s230 = sand.u32 %s23, 1
          %s231 = scalar_lea.sflag [#allocation6], %s230
          %s232 = sand.u32 %s99, 1
          %s233 = smul.addr %s232, 8
          %s234 = scalar_lea.vmem [#allocation7], %s233
          %s236 = ssub.s32 128, 128
          %237 = vsyncadd %s231, %s236
          %s238 = smul.addr %s30, 128
          %s239 = scalar_lea.hbm %s2, %s238
          %s241 = sshll.u32 %s234, 4
          %s242 = int_to_ptr.vmem [resolvable:$true] %s241
          %244 = dma.hbm_to_vmem [thread:$0]  %s239, 128, %s242, %s231
        $region28: #{multi_head_self_attention.8} parent=15 // pred_fallthru
          _
      $region16: #{multi_head_self_attention.8} parent=5 // pred_fallthru
        _
      %p245 = scmp.le.s32.totalorder 1, %s23
      %p246 = scmp.lt.s32.totalorder %s23, 3
      %p247 = pnand %p245, %p246
      %p248 = pneg %p247
      // Predicated region
      $region29: #{multi_head_self_attention.8} parent=5 // pred_check
        _
      $region30: #{multi_head_self_attention.8} parent=5 // pred_check_branch
        %250 = sbr.rel (%p247) target = $region32
      $region31: #{multi_head_self_attention.8} parent=5 // pred_region
        %s251 = ssub.s32 %s23, 1
        %s252 = sand.u32 %s50, 1
        %s253 = scalar_lea.sflag [#allocation3], %s252
        %s254 = sand.u32 %s50, 1
        %s255 = smul.addr %s254, 8
        %s256 = scalar_lea.vmem [#allocation2], %s255
        // Predicated region
        $region33: #{multi_head_self_attention.8} parent=31 // pred_check
          %p257 = pneg %p63
        $region34: #{multi_head_self_attention.8} parent=31 // pred_check_branch
          %259 = sbr.rel (%p257) target = $region36
        $region35: #{multi_head_self_attention.8} parent=31 // pred_region
          %260 = dma.done %s253, 128
        $region36: #{multi_head_self_attention.8} parent=31 // pred_fallthru
          _
        %s261 = sand.u32 %s28, 1
        %s262 = scalar_lea.sflag [#allocation6], %s261
        %s263 = sand.u32 %s76, 1
        %s264 = smul.addr %s263, 8
        %s265 = scalar_lea.vmem [#allocation5], %s264
        // Predicated region
        $region37: #{multi_head_self_attention.8} parent=31 // pred_check
          %p266 = pneg %p89
        $region38: #{multi_head_self_attention.8} parent=31 // pred_check_branch
          %268 = sbr.rel (%p266) target = $region40
        $region39: #{multi_head_self_attention.8} parent=31 // pred_region
          %269 = dma.done %s262, 128
        $region40: #{multi_head_self_attention.8} parent=31 // pred_fallthru
          _
        %s270 = sand.u32 %s28, 1
        %s271 = scalar_lea.sflag [#allocation6], %s270
        %s272 = sand.u32 %s102, 1
        %s273 = smul.addr %s272, 8
        %s274 = scalar_lea.vmem [#allocation7], %s273
        // Predicated region
        $region41: #{multi_head_self_attention.8} parent=31 // pred_check
          %p275 = pneg %p115
        $region42: #{multi_head_self_attention.8} parent=31 // pred_check_branch
          %277 = sbr.rel (%p275) target = $region44
        $region43: #{multi_head_self_attention.8} parent=31 // pred_region
          %278 = dma.done %s271, 128
        $region44: #{multi_head_self_attention.8} parent=31 // pred_fallthru
          _
        %s279 = sand.u32 %s50, 1
        %s280 = scalar_lea.sflag [#allocation3], %s279
        %s281 = sand.u32 %s50, 1
        %s282 = smul.addr %s281, 8
        %s283 = scalar_lea.vmem [#allocation2], %s282
        %p284 = pneg %p63
        %p285 = pneg %p60
        %s286 = sand.u32 %s28, 1
        %s287 = scalar_lea.sflag [#allocation6], %s286
        %s288 = sand.u32 %s76, 1
        %s289 = smul.addr %s288, 8
        %s290 = scalar_lea.vmem [#allocation5], %s289
        %p291 = pneg %p89
        %p292 = pneg %p86
        %s293 = sand.u32 %s28, 1
        %s294 = scalar_lea.sflag [#allocation6], %s293
        %s295 = sand.u32 %s102, 1
        %s296 = smul.addr %s295, 8
        %s297 = scalar_lea.vmem [#allocation7], %s296
        %p298 = pneg %p115
        %p299 = pneg %p112
        %p300 = pneg %p143
        %p301 = pneg %p140
        %s302 = sand.u32 %s130, 1
        %s303 = scalar_lea.sflag [#allocation4], %s302
        %s304 = sand.u32 %s130, 1
        %s305 = smul.addr %s304, 8
        %s306 = scalar_lea.vmem [#allocation8], %s305
        %p307 = pneg %p171
        %p308 = pneg %p168
        %s309 = sand.u32 %s158, 1
        %s310 = scalar_lea.sflag [#allocation10], %s309
        %s311 = sand.u32 %s158, 1
        %s312 = smul.addr %s311, 32
        %s313 = scalar_lea.vmem [#allocation9], %s312
        %v314 = vld [vmem:[%s256] sm:$0xff]
        %v315 = vld [vmem:[%s265] sm:$0xff]
        %v316 = vld [vmem:[%s274] sm:$0xff]
        %vm317 = vcmask 64512
        %v319 = vsel %vm317, %v314, 0
        %v322 = vsel %vm317, %v315, 0
        %324 = vmatprep.subr.mxu0 0.0
        %325 = vmatpush1.xpose.msra.mxu0 %v322
        %326 = vmatprep.subr.mxu0 0.0
        %327 = vmatpush1.xpose.msra.mxu0 0.0
        %328 = vmatprep.subr.mxu0 0.0
        %329 = vmatpush1.xpose.msra.mxu0 0.0
        %330 = vmatprep.subr.mxu0 0.0
        %331 = vmatpush1.xpose.msra.mxu0 0.0
        %332 = vmatprep.subr.mxu0 0.0
        %333 = vmatpush1.xpose.msra.mxu0 0.0
        %334 = vmatprep.subr.mxu0 0.0
        %335 = vmatpush1.xpose.msra.mxu0 0.0
        %336 = vmatprep.subr.mxu0 0.0
        %337 = vmatpush1.xpose.msra.mxu0 0.0
        %338 = vmatprep.subr.mxu0 0.0
        %339 = vmatpush1.xpose.msra.mxu0 0.0
        %340 = vmatprep.subr.mxu0 0.0
        %341 = vmatpush1.xpose.msra.mxu0 0.0
        %342 = vmatprep.subr.mxu0 0.0
        %343 = vmatpush1.xpose.msra.mxu0 0.0
        %344 = vmatprep.subr.mxu0 0.0
        %345 = vmatpush1.xpose.msra.mxu0 0.0
        %346 = vmatprep.subr.mxu0 0.0
        %347 = vmatpush1.xpose.msra.mxu0 0.0
        %348 = vmatprep.subr.mxu0 0.0
        %349 = vmatpush1.xpose.msra.mxu0 0.0
        %350 = vmatprep.subr.mxu0 0.0
        %351 = vmatpush1.xpose.msra.mxu0 0.0
        %352 = vmatprep.subr.mxu0 0.0
        %353 = vmatpush1.xpose.msra.mxu0 0.0
        %354 = vmatprep.subr.mxu0 0.0
        %355 = vmatpush1.xpose.msra.mxu0 0.0
        %356 = vmatprep.subr.mxu0 0.0
        %357 = vmatpush1.xpose.msra.mxu0 0.0
        %358 = vmatprep.subr.mxu0 0.0
        %359 = vmatpush1.xpose.msra.mxu0 0.0
        %360 = vmatprep.subr.mxu0 0.0
        %361 = vmatpush1.xpose.msra.mxu0 0.0
        %362 = vmatprep.subr.mxu0 0.0
        %363 = vmatpush1.xpose.msra.mxu0 0.0
        %364 = vmatprep.subr.mxu0 0.0
        %365 = vmatpush1.xpose.msra.mxu0 0.0
        %366 = vmatprep.subr.mxu0 0.0
        %367 = vmatpush1.xpose.msra.mxu0 0.0
        %368 = vmatprep.subr.mxu0 0.0
        %369 = vmatpush1.xpose.msra.mxu0 0.0
        %370 = vmatprep.subr.mxu0 0.0
        %371 = vmatpush1.xpose.msra.mxu0 0.0
        %372 = vmatprep.subr.mxu0 0.0
        %373 = vmatpush1.xpose.msra.mxu0 0.0
        %374 = vmatprep.subr.mxu0 0.0
        %375 = vmatpush1.xpose.msra.mxu0 0.0
        %376 = vmatprep.subr.mxu0 0.0
        %377 = vmatpush1.xpose.msra.mxu0 0.0
        %378 = vmatprep.subr.mxu0 0.0
        %379 = vmatpush1.xpose.msra.mxu0 0.0
        %380 = vmatprep.subr.mxu0 0.0
        %381 = vmatpush1.xpose.msra.mxu0 0.0
        %382 = vmatprep.subr.mxu0 0.0
        %383 = vmatpush1.xpose.msra.mxu0 0.0
        %384 = vmatprep.subr.mxu0 0.0
        %385 = vmatpush1.xpose.msra.mxu0 0.0
        %386 = vmatprep.subr.mxu0 0.0
        %387 = vmatpush1.xpose.msra.mxu0 0.0
        %388 = vmatprep.mubr.f32.mxu0 0.0
        %389 = vmatmul.mubr.f32.gmra.mrb[0].mxu0 %v319
        %v390 = vpop.f32.mrb[0].mxu0
        %v391 = vadd.f32 0.0, %v390
        %v392 = vpop.f32.mrb[0].mxu0
        %393 = vdwg.mxu0
        %v394 = vmul.f32 %v391, 0.35355338
        %v395 = vsel %vm317, %v394, -inf
        %396 = vmax.xlane.f32.xlu0 %v395
        %v397 = vpop.xlane.xlu0 %396
        %v398 = vsub.f32 %v394, %v397
        %v399 = vmul.f32 %v398, 1.442695
        %v400 = vpow.pop %v399
        %v401 = vsel %vm317, %v400, 0.0
        %402 = vadd.xlane.f32.xlu0 %v401
        %v403 = vpop.xlane.xlu0 %402
        %v404 = vrcp.pop %v403
        %v405 = vmul.f32 %v400, %v404
        %406 = vst.msk [vmem:[%s313] sm:$0xff] %vm317, %v405
        %v408 = vsel %vm317, %v405, 0
        %410 = vmatprep.subr.mxu0 0.0
        %411 = vmatpush1.msra.mxu0 %v316
        %412 = vmatprep.subr.mxu0 0.0
        %413 = vmatpush1.msra.mxu0 0.0
        %414 = vmatprep.subr.mxu0 0.0
        %415 = vmatpush1.msra.mxu0 0.0
        %416 = vmatprep.subr.mxu0 0.0
        %417 = vmatpush1.msra.mxu0 0.0
        %418 = vmatprep.subr.mxu0 0.0
        %419 = vmatpush1.msra.mxu0 0.0
        %420 = vmatprep.subr.mxu0 0.0
        %421 = vmatpush1.msra.mxu0 0.0
        %422 = vmatprep.subr.mxu0 0.0
        %423 = vmatpush1.msra.mxu0 0.0
        %424 = vmatprep.subr.mxu0 0.0
        %425 = vmatpush1.msra.mxu0 0.0
        %426 = vmatprep.subr.mxu0 0.0
        %427 = vmatpush1.msra.mxu0 0.0
        %428 = vmatprep.subr.mxu0 0.0
        %429 = vmatpush1.msra.mxu0 0.0
        %430 = vmatprep.subr.mxu0 0.0
        %431 = vmatpush1.msra.mxu0 0.0
        %432 = vmatprep.subr.mxu0 0.0
        %433 = vmatpush1.msra.mxu0 0.0
        %434 = vmatprep.subr.mxu0 0.0
        %435 = vmatpush1.msra.mxu0 0.0
        %436 = vmatprep.subr.mxu0 0.0
        %437 = vmatpush1.msra.mxu0 0.0
        %438 = vmatprep.subr.mxu0 0.0
        %439 = vmatpush1.msra.mxu0 0.0
        %440 = vmatprep.subr.mxu0 0.0
        %441 = vmatpush1.msra.mxu0 0.0
        %442 = vmatprep.subr.mxu0 0.0
        %443 = vmatpush1.msra.mxu0 0.0
        %444 = vmatprep.subr.mxu0 0.0
        %445 = vmatpush1.msra.mxu0 0.0
        %446 = vmatprep.subr.mxu0 0.0
        %447 = vmatpush1.msra.mxu0 0.0
        %448 = vmatprep.subr.mxu0 0.0
        %449 = vmatpush1.msra.mxu0 0.0
        %450 = vmatprep.subr.mxu0 0.0
        %451 = vmatpush1.msra.mxu0 0.0
        %452 = vmatprep.subr.mxu0 0.0
        %453 = vmatpush1.msra.mxu0 0.0
        %454 = vmatprep.subr.mxu0 0.0
        %455 = vmatpush1.msra.mxu0 0.0
        %456 = vmatprep.subr.mxu0 0.0
        %457 = vmatpush1.msra.mxu0 0.0
        %458 = vmatprep.subr.mxu0 0.0
        %459 = vmatpush1.msra.mxu0 0.0
        %460 = vmatprep.subr.mxu0 0.0
        %461 = vmatpush1.msra.mxu0 0.0
        %462 = vmatprep.subr.mxu0 0.0
        %463 = vmatpush1.msra.mxu0 0.0
        %464 = vmatprep.subr.mxu0 0.0
        %465 = vmatpush1.msra.mxu0 0.0
        %466 = vmatprep.subr.mxu0 0.0
        %467 = vmatpush1.msra.mxu0 0.0
        %468 = vmatprep.subr.mxu0 0.0
        %469 = vmatpush1.msra.mxu0 0.0
        %470 = vmatprep.subr.mxu0 0.0
        %471 = vmatpush1.msra.mxu0 0.0
        %472 = vmatprep.subr.mxu0 0.0
        %473 = vmatpush1.msra.mxu0 0.0
        %474 = vmatprep.mubr.f32.mxu0 0.0
        %475 = vmatmul.mubr.f32.gmra.mrb[0].mxu0 %v408
        %v476 = vpop.f32.mrb[0].mxu0
        %v477 = vadd.f32 0.0, %v476
        %v478 = vpop.f32.mrb[0].mxu0
        %479 = vdwg.mxu0
        %480 = vrot.lane.b32.xlu0 %v314, 120
        %v481 = vpop.permute.xlu0 %480
        %482 = vrot.lane.b32.xlu0 %v315, 120
        %v483 = vpop.permute.xlu0 %482
        %v484 = vsel %vm317, %v481, 0
        %v486 = vsel %vm317, %v483, 0
        %488 = vmatprep.subr.mxu0 0.0
        %489 = vmatpush1.xpose.msra.mxu0 %v486
        %490 = vmatprep.subr.mxu0 0.0
        %491 = vmatpush1.xpose.msra.mxu0 0.0
        %492 = vmatprep.subr.mxu0 0.0
        %493 = vmatpush1.xpose.msra.mxu0 0.0
        %494 = vmatprep.subr.mxu0 0.0
        %495 = vmatpush1.xpose.msra.mxu0 0.0
        %496 = vmatprep.subr.mxu0 0.0
        %497 = vmatpush1.xpose.msra.mxu0 0.0
        %498 = vmatprep.subr.mxu0 0.0
        %499 = vmatpush1.xpose.msra.mxu0 0.0
        %500 = vmatprep.subr.mxu0 0.0
        %501 = vmatpush1.xpose.msra.mxu0 0.0
        %502 = vmatprep.subr.mxu0 0.0
        %503 = vmatpush1.xpose.msra.mxu0 0.0
        %504 = vmatprep.subr.mxu0 0.0
        %505 = vmatpush1.xpose.msra.mxu0 0.0
        %506 = vmatprep.subr.mxu0 0.0
        %507 = vmatpush1.xpose.msra.mxu0 0.0
        %508 = vmatprep.subr.mxu0 0.0
        %509 = vmatpush1.xpose.msra.mxu0 0.0
        %510 = vmatprep.subr.mxu0 0.0
        %511 = vmatpush1.xpose.msra.mxu0 0.0
        %512 = vmatprep.subr.mxu0 0.0
        %513 = vmatpush1.xpose.msra.mxu0 0.0
        %514 = vmatprep.subr.mxu0 0.0
        %515 = vmatpush1.xpose.msra.mxu0 0.0
        %516 = vmatprep.subr.mxu0 0.0
        %517 = vmatpush1.xpose.msra.mxu0 0.0
        %518 = vmatprep.subr.mxu0 0.0
        %519 = vmatpush1.xpose.msra.mxu0 0.0
        %520 = vmatprep.subr.mxu0 0.0
        %521 = vmatpush1.xpose.msra.mxu0 0.0
        %522 = vmatprep.subr.mxu0 0.0
        %523 = vmatpush1.xpose.msra.mxu0 0.0
        %524 = vmatprep.subr.mxu0 0.0
        %525 = vmatpush1.xpose.msra.mxu0 0.0
        %526 = vmatprep.subr.mxu0 0.0
        %527 = vmatpush1.xpose.msra.mxu0 0.0
        %528 = vmatprep.subr.mxu0 0.0
        %529 = vmatpush1.xpose.msra.mxu0 0.0
        %530 = vmatprep.subr.mxu0 0.0
        %531 = vmatpush1.xpose.msra.mxu0 0.0
        %532 = vmatprep.subr.mxu0 0.0
        %533 = vmatpush1.xpose.msra.mxu0 0.0
        %534 = vmatprep.subr.mxu0 0.0
        %535 = vmatpush1.xpose.msra.mxu0 0.0
        %536 = vmatprep.subr.mxu0 0.0
        %537 = vmatpush1.xpose.msra.mxu0 0.0
        %538 = vmatprep.subr.mxu0 0.0
        %539 = vmatpush1.xpose.msra.mxu0 0.0
        %540 = vmatprep.subr.mxu0 0.0
        %541 = vmatpush1.xpose.msra.mxu0 0.0
        %542 = vmatprep.subr.mxu0 0.0
        %543 = vmatpush1.xpose.msra.mxu0 0.0
        %544 = vmatprep.subr.mxu0 0.0
        %545 = vmatpush1.xpose.msra.mxu0 0.0
        %546 = vmatprep.subr.mxu0 0.0
        %547 = vmatpush1.xpose.msra.mxu0 0.0
        %548 = vmatprep.subr.mxu0 0.0
        %549 = vmatpush1.xpose.msra.mxu0 0.0
        %550 = vmatprep.subr.mxu0 0.0
        %551 = vmatpush1.xpose.msra.mxu0 0.0
        %552 = vmatprep.mubr.f32.mxu0 0.0
        %553 = vmatmul.mubr.f32.gmra.mrb[0].mxu0 %v484
        %v554 = vpop.f32.mrb[0].mxu0
        %v555 = vadd.f32 0.0, %v554
        %v556 = vpop.f32.mrb[0].mxu0
        %557 = vdwg.mxu0
        %v558 = vmul.f32 %v555, 0.35355338
        %v559 = vsel %vm317, %v558, -inf
        %560 = vmax.xlane.f32.xlu0 %v559
        %v561 = vpop.xlane.xlu0 %560
        %v562 = vsub.f32 %v558, %v561
        %v563 = vmul.f32 %v562, 1.442695
        %v564 = vpow.pop %v563
        %v565 = vsel %vm317, %v564, 0.0
        %566 = vadd.xlane.f32.xlu0 %v565
        %v567 = vpop.xlane.xlu0 %566
        %v568 = vrcp.pop %v567
        %v569 = vmul.f32 %v564, %v568
        %s570 = scalar_lea.vmem %s313, 8 [#allocation9]
        %571 = vst.msk [vmem:[%s570] sm:$0xff] %vm317, %v569
        %573 = vrot.lane.b32.xlu0 %v316, 120
        %v574 = vpop.permute.xlu0 %573
        %v577 = vsel %vm317, %v569, 0
        %579 = vmatprep.subr.mxu0 0.0
        %580 = vmatpush1.msra.mxu0 %v574
        %581 = vmatprep.subr.mxu0 0.0
        %582 = vmatpush1.msra.mxu0 0.0
        %583 = vmatprep.subr.mxu0 0.0
        %584 = vmatpush1.msra.mxu0 0.0
        %585 = vmatprep.subr.mxu0 0.0
        %586 = vmatpush1.msra.mxu0 0.0
        %587 = vmatprep.subr.mxu0 0.0
        %588 = vmatpush1.msra.mxu0 0.0
        %589 = vmatprep.subr.mxu0 0.0
        %590 = vmatpush1.msra.mxu0 0.0
        %591 = vmatprep.subr.mxu0 0.0
        %592 = vmatpush1.msra.mxu0 0.0
        %593 = vmatprep.subr.mxu0 0.0
        %594 = vmatpush1.msra.mxu0 0.0
        %595 = vmatprep.subr.mxu0 0.0
        %596 = vmatpush1.msra.mxu0 0.0
        %597 = vmatprep.subr.mxu0 0.0
        %598 = vmatpush1.msra.mxu0 0.0
        %599 = vmatprep.subr.mxu0 0.0
        %600 = vmatpush1.msra.mxu0 0.0
        %601 = vmatprep.subr.mxu0 0.0
        %602 = vmatpush1.msra.mxu0 0.0
        %603 = vmatprep.subr.mxu0 0.0
        %604 = vmatpush1.msra.mxu0 0.0
        %605 = vmatprep.subr.mxu0 0.0
        %606 = vmatpush1.msra.mxu0 0.0
        %607 = vmatprep.subr.mxu0 0.0
        %608 = vmatpush1.msra.mxu0 0.0
        %609 = vmatprep.subr.mxu0 0.0
        %610 = vmatpush1.msra.mxu0 0.0
        %611 = vmatprep.subr.mxu0 0.0
        %612 = vmatpush1.msra.mxu0 0.0
        %613 = vmatprep.subr.mxu0 0.0
        %614 = vmatpush1.msra.mxu0 0.0
        %615 = vmatprep.subr.mxu0 0.0
        %616 = vmatpush1.msra.mxu0 0.0
        %617 = vmatprep.subr.mxu0 0.0
        %618 = vmatpush1.msra.mxu0 0.0
        %619 = vmatprep.subr.mxu0 0.0
        %620 = vmatpush1.msra.mxu0 0.0
        %621 = vmatprep.subr.mxu0 0.0
        %622 = vmatpush1.msra.mxu0 0.0
        %623 = vmatprep.subr.mxu0 0.0
        %624 = vmatpush1.msra.mxu0 0.0
        %625 = vmatprep.subr.mxu0 0.0
        %626 = vmatpush1.msra.mxu0 0.0
        %627 = vmatprep.subr.mxu0 0.0
        %628 = vmatpush1.msra.mxu0 0.0
        %629 = vmatprep.subr.mxu0 0.0
        %630 = vmatpush1.msra.mxu0 0.0
        %631 = vmatprep.subr.mxu0 0.0
        %632 = vmatpush1.msra.mxu0 0.0
        %633 = vmatprep.subr.mxu0 0.0
        %634 = vmatpush1.msra.mxu0 0.0
        %635 = vmatprep.subr.mxu0 0.0
        %636 = vmatpush1.msra.mxu0 0.0
        %637 = vmatprep.subr.mxu0 0.0
        %638 = vmatpush1.msra.mxu0 0.0
        %639 = vmatprep.subr.mxu0 0.0
        %640 = vmatpush1.msra.mxu0 0.0
        %641 = vmatprep.subr.mxu0 0.0
        %642 = vmatpush1.msra.mxu0 0.0
        %643 = vmatprep.mubr.f32.mxu0 0.0
        %644 = vmatmul.mubr.f32.gmra.mrb[0].mxu0 %v577
        %v645 = vpop.f32.mrb[0].mxu0
        %v646 = vadd.f32 0.0, %v645
        %v647 = vpop.f32.mrb[0].mxu0
        %648 = vdwg.mxu0
        %649 = vrot.lane.b32.xlu0 %v314, 112
        %v650 = vpop.permute.xlu0 %649
        %651 = vrot.lane.b32.xlu0 %v315, 112
        %v652 = vpop.permute.xlu0 %651
        %v653 = vsel %vm317, %v650, 0
        %v655 = vsel %vm317, %v652, 0
        %657 = vmatprep.subr.mxu0 0.0
        %658 = vmatpush1.xpose.msra.mxu0 %v655
        %659 = vmatprep.subr.mxu0 0.0
        %660 = vmatpush1.xpose.msra.mxu0 0.0
        %661 = vmatprep.subr.mxu0 0.0
        %662 = vmatpush1.xpose.msra.mxu0 0.0
        %663 = vmatprep.subr.mxu0 0.0
        %664 = vmatpush1.xpose.msra.mxu0 0.0
        %665 = vmatprep.subr.mxu0 0.0
        %666 = vmatpush1.xpose.msra.mxu0 0.0
        %667 = vmatprep.subr.mxu0 0.0
        %668 = vmatpush1.xpose.msra.mxu0 0.0
        %669 = vmatprep.subr.mxu0 0.0
        %670 = vmatpush1.xpose.msra.mxu0 0.0
        %671 = vmatprep.subr.mxu0 0.0
        %672 = vmatpush1.xpose.msra.mxu0 0.0
        %673 = vmatprep.subr.mxu0 0.0
        %674 = vmatpush1.xpose.msra.mxu0 0.0
        %675 = vmatprep.subr.mxu0 0.0
        %676 = vmatpush1.xpose.msra.mxu0 0.0
        %677 = vmatprep.subr.mxu0 0.0
        %678 = vmatpush1.xpose.msra.mxu0 0.0
        %679 = vmatprep.subr.mxu0 0.0
        %680 = vmatpush1.xpose.msra.mxu0 0.0
        %681 = vmatprep.subr.mxu0 0.0
        %682 = vmatpush1.xpose.msra.mxu0 0.0
        %683 = vmatprep.subr.mxu0 0.0
        %684 = vmatpush1.xpose.msra.mxu0 0.0
        %685 = vmatprep.subr.mxu0 0.0
        %686 = vmatpush1.xpose.msra.mxu0 0.0
        %687 = vmatprep.subr.mxu0 0.0
        %688 = vmatpush1.xpose.msra.mxu0 0.0
        %689 = vmatprep.subr.mxu0 0.0
        %690 = vmatpush1.xpose.msra.mxu0 0.0
        %691 = vmatprep.subr.mxu0 0.0
        %692 = vmatpush1.xpose.msra.mxu0 0.0
        %693 = vmatprep.subr.mxu0 0.0
        %694 = vmatpush1.xpose.msra.mxu0 0.0
        %695 = vmatprep.subr.mxu0 0.0
        %696 = vmatpush1.xpose.msra.mxu0 0.0
        %697 = vmatprep.subr.mxu0 0.0
        %698 = vmatpush1.xpose.msra.mxu0 0.0
        %699 = vmatprep.subr.mxu0 0.0
        %700 = vmatpush1.xpose.msra.mxu0 0.0
        %701 = vmatprep.subr.mxu0 0.0
        %702 = vmatpush1.xpose.msra.mxu0 0.0
        %703 = vmatprep.subr.mxu0 0.0
        %704 = vmatpush1.xpose.msra.mxu0 0.0
        %705 = vmatprep.subr.mxu0 0.0
        %706 = vmatpush1.xpose.msra.mxu0 0.0
        %707 = vmatprep.subr.mxu0 0.0
        %708 = vmatpush1.xpose.msra.mxu0 0.0
        %709 = vmatprep.subr.mxu0 0.0
        %710 = vmatpush1.xpose.msra.mxu0 0.0
        %711 = vmatprep.subr.mxu0 0.0
        %712 = vmatpush1.xpose.msra.mxu0 0.0
        %713 = vmatprep.subr.mxu0 0.0
        %714 = vmatpush1.xpose.msra.mxu0 0.0
        %715 = vmatprep.subr.mxu0 0.0
        %716 = vmatpush1.xpose.msra.mxu0 0.0
        %717 = vmatprep.subr.mxu0 0.0
        %718 = vmatpush1.xpose.msra.mxu0 0.0
        %719 = vmatprep.subr.mxu0 0.0
        %720 = vmatpush1.xpose.msra.mxu0 0.0
        %721 = vmatprep.mubr.f32.mxu0 0.0
        %722 = vmatmul.mubr.f32.gmra.mrb[0].mxu0 %v653
        %v723 = vpop.f32.mrb[0].mxu0
        %v724 = vadd.f32 0.0, %v723
        %v725 = vpop.f32.mrb[0].mxu0
        %726 = vdwg.mxu0
        %v727 = vmul.f32 %v724, 0.35355338
        %v728 = vsel %vm317, %v727, -inf
        %729 = vmax.xlane.f32.xlu0 %v728
        %v730 = vpop.xlane.xlu0 %729
        %v731 = vsub.f32 %v727, %v730
        %v732 = vmul.f32 %v731, 1.442695
        %v733 = vpow.pop %v732
        %v734 = vsel %vm317, %v733, 0.0
        %735 = vadd.xlane.f32.xlu0 %v734
        %v736 = vpop.xlane.xlu0 %735
        %v737 = vrcp.pop %v736
        %v738 = vmul.f32 %v733, %v737
        %s739 = scalar_lea.vmem %s313, 16 [#allocation9]
        %740 = vst.msk [vmem:[%s739] sm:$0xff] %vm317, %v738
        %741 = vrot.lane.b32.xlu0 %v316, 112
        %v742 = vpop.permute.xlu0 %741
        %v745 = vsel %vm317, %v738, 0
        %747 = vmatprep.subr.mxu0 0.0
        %748 = vmatpush1.msra.mxu0 %v742
        %749 = vmatprep.subr.mxu0 0.0
        %750 = vmatpush1.msra.mxu0 0.0
        %751 = vmatprep.subr.mxu0 0.0
        %752 = vmatpush1.msra.mxu0 0.0
        %753 = vmatprep.subr.mxu0 0.0
        %754 = vmatpush1.msra.mxu0 0.0
        %755 = vmatprep.subr.mxu0 0.0
        %756 = vmatpush1.msra.mxu0 0.0
        %757 = vmatprep.subr.mxu0 0.0
        %758 = vmatpush1.msra.mxu0 0.0
        %759 = vmatprep.subr.mxu0 0.0
        %760 = vmatpush1.msra.mxu0 0.0
        %761 = vmatprep.subr.mxu0 0.0
        %762 = vmatpush1.msra.mxu0 0.0
        %763 = vmatprep.subr.mxu0 0.0
        %764 = vmatpush1.msra.mxu0 0.0
        %765 = vmatprep.subr.mxu0 0.0
        %766 = vmatpush1.msra.mxu0 0.0
        %767 = vmatprep.subr.mxu0 0.0
        %768 = vmatpush1.msra.mxu0 0.0
        %769 = vmatprep.subr.mxu0 0.0
        %770 = vmatpush1.msra.mxu0 0.0
        %771 = vmatprep.subr.mxu0 0.0
        %772 = vmatpush1.msra.mxu0 0.0
        %773 = vmatprep.subr.mxu0 0.0
        %774 = vmatpush1.msra.mxu0 0.0
        %775 = vmatprep.subr.mxu0 0.0
        %776 = vmatpush1.msra.mxu0 0.0
        %777 = vmatprep.subr.mxu0 0.0
        %778 = vmatpush1.msra.mxu0 0.0
        %779 = vmatprep.subr.mxu0 0.0
        %780 = vmatpush1.msra.mxu0 0.0
        %781 = vmatprep.subr.mxu0 0.0
        %782 = vmatpush1.msra.mxu0 0.0
        %783 = vmatprep.subr.mxu0 0.0
        %784 = vmatpush1.msra.mxu0 0.0
        %785 = vmatprep.subr.mxu0 0.0
        %786 = vmatpush1.msra.mxu0 0.0
        %787 = vmatprep.subr.mxu0 0.0
        %788 = vmatpush1.msra.mxu0 0.0
        %789 = vmatprep.subr.mxu0 0.0
        %790 = vmatpush1.msra.mxu0 0.0
        %791 = vmatprep.subr.mxu0 0.0
        %792 = vmatpush1.msra.mxu0 0.0
        %793 = vmatprep.subr.mxu0 0.0
        %794 = vmatpush1.msra.mxu0 0.0
        %795 = vmatprep.subr.mxu0 0.0
        %796 = vmatpush1.msra.mxu0 0.0
        %797 = vmatprep.subr.mxu0 0.0
        %798 = vmatpush1.msra.mxu0 0.0
        %799 = vmatprep.subr.mxu0 0.0
        %800 = vmatpush1.msra.mxu0 0.0
        %801 = vmatprep.subr.mxu0 0.0
        %802 = vmatpush1.msra.mxu0 0.0
        %803 = vmatprep.subr.mxu0 0.0
        %804 = vmatpush1.msra.mxu0 0.0
        %805 = vmatprep.subr.mxu0 0.0
        %806 = vmatpush1.msra.mxu0 0.0
        %807 = vmatprep.subr.mxu0 0.0
        %808 = vmatpush1.msra.mxu0 0.0
        %809 = vmatprep.subr.mxu0 0.0
        %810 = vmatpush1.msra.mxu0 0.0
        %811 = vmatprep.mubr.f32.mxu0 0.0
        %812 = vmatmul.mubr.f32.gmra.mrb[0].mxu0 %v745
        %v813 = vpop.f32.mrb[0].mxu0
        %v814 = vadd.f32 0.0, %v813
        %v815 = vpop.f32.mrb[0].mxu0
        %816 = vdwg.mxu0
        %817 = vrot.lane.b32.xlu0 %v314, 104
        %v818 = vpop.permute.xlu0 %817
        %819 = vrot.lane.b32.xlu0 %v315, 104
        %v820 = vpop.permute.xlu0 %819
        %v821 = vsel %vm317, %v818, 0
        %v823 = vsel %vm317, %v820, 0
        %825 = vmatprep.subr.mxu0 0.0
        %826 = vmatpush1.xpose.msra.mxu0 %v823
        %827 = vmatprep.subr.mxu0 0.0
        %828 = vmatpush1.xpose.msra.mxu0 0.0
        %829 = vmatprep.subr.mxu0 0.0
        %830 = vmatpush1.xpose.msra.mxu0 0.0
        %831 = vmatprep.subr.mxu0 0.0
        %832 = vmatpush1.xpose.msra.mxu0 0.0
        %833 = vmatprep.subr.mxu0 0.0
        %834 = vmatpush1.xpose.msra.mxu0 0.0
        %835 = vmatprep.subr.mxu0 0.0
        %836 = vmatpush1.xpose.msra.mxu0 0.0
        %837 = vmatprep.subr.mxu0 0.0
        %838 = vmatpush1.xpose.msra.mxu0 0.0
        %839 = vmatprep.subr.mxu0 0.0
        %840 = vmatpush1.xpose.msra.mxu0 0.0
        %841 = vmatprep.subr.mxu0 0.0
        %842 = vmatpush1.xpose.msra.mxu0 0.0
        %843 = vmatprep.subr.mxu0 0.0
        %844 = vmatpush1.xpose.msra.mxu0 0.0
        %845 = vmatprep.subr.mxu0 0.0
        %846 = vmatpush1.xpose.msra.mxu0 0.0
        %847 = vmatprep.subr.mxu0 0.0
        %848 = vmatpush1.xpose.msra.mxu0 0.0
        %849 = vmatprep.subr.mxu0 0.0
        %850 = vmatpush1.xpose.msra.mxu0 0.0
        %851 = vmatprep.subr.mxu0 0.0
        %852 = vmatpush1.xpose.msra.mxu0 0.0
        %853 = vmatprep.subr.mxu0 0.0
        %854 = vmatpush1.xpose.msra.mxu0 0.0
        %855 = vmatprep.subr.mxu0 0.0
        %856 = vmatpush1.xpose.msra.mxu0 0.0
        %857 = vmatprep.subr.mxu0 0.0
        %858 = vmatpush1.xpose.msra.mxu0 0.0
        %859 = vmatprep.subr.mxu0 0.0
        %860 = vmatpush1.xpose.msra.mxu0 0.0
        %861 = vmatprep.subr.mxu0 0.0
        %862 = vmatpush1.xpose.msra.mxu0 0.0
        %863 = vmatprep.subr.mxu0 0.0
        %864 = vmatpush1.xpose.msra.mxu0 0.0
        %865 = vmatprep.subr.mxu0 0.0
        %866 = vmatpush1.xpose.msra.mxu0 0.0
        %867 = vmatprep.subr.mxu0 0.0
        %868 = vmatpush1.xpose.msra.mxu0 0.0
        %869 = vmatprep.subr.mxu0 0.0
        %870 = vmatpush1.xpose.msra.mxu0 0.0
        %871 = vmatprep.subr.mxu0 0.0
        %872 = vmatpush1.xpose.msra.mxu0 0.0
        %873 = vmatprep.subr.mxu0 0.0
        %874 = vmatpush1.xpose.msra.mxu0 0.0
        %875 = vmatprep.subr.mxu0 0.0
        %876 = vmatpush1.xpose.msra.mxu0 0.0
        %877 = vmatprep.subr.mxu0 0.0
        %878 = vmatpush1.xpose.msra.mxu0 0.0
        %879 = vmatprep.subr.mxu0 0.0
        %880 = vmatpush1.xpose.msra.mxu0 0.0
        %881 = vmatprep.subr.mxu0 0.0
        %882 = vmatpush1.xpose.msra.mxu0 0.0
        %883 = vmatprep.subr.mxu0 0.0
        %884 = vmatpush1.xpose.msra.mxu0 0.0
        %885 = vmatprep.subr.mxu0 0.0
        %886 = vmatpush1.xpose.msra.mxu0 0.0
        %887 = vmatprep.subr.mxu0 0.0
        %888 = vmatpush1.xpose.msra.mxu0 0.0
        %889 = vmatprep.mubr.f32.mxu0 0.0
        %890 = vmatmul.mubr.f32.gmra.mrb[0].mxu0 %v821
        %v891 = vpop.f32.mrb[0].mxu0
        %v892 = vadd.f32 0.0, %v891
        %v893 = vpop.f32.mrb[0].mxu0
        %894 = vdwg.mxu0
        %v895 = vmul.f32 %v892, 0.35355338
        %v896 = vsel %vm317, %v895, -inf
        %897 = vmax.xlane.f32.xlu0 %v896
        %v898 = vpop.xlane.xlu0 %897
        %v899 = vsub.f32 %v895, %v898
        %v900 = vmul.f32 %v899, 1.442695
        %v901 = vpow.pop %v900
        %v902 = vsel %vm317, %v901, 0.0
        %903 = vadd.xlane.f32.xlu0 %v902
        %v904 = vpop.xlane.xlu0 %903
        %v905 = vrcp.pop %v904
        %v906 = vmul.f32 %v901, %v905
        %s907 = scalar_lea.vmem %s313, 24 [#allocation9]
        %908 = vst.msk [vmem:[%s907] sm:$0xff] %vm317, %v906
        %909 = vrot.lane.b32.xlu0 %v316, 104
        %v910 = vpop.permute.xlu0 %909
        %v913 = vsel %vm317, %v906, 0
        %915 = vmatprep.subr.mxu0 0.0
        %916 = vmatpush1.msra.mxu0 %v910
        %917 = vmatprep.subr.mxu0 0.0
        %918 = vmatpush1.msra.mxu0 0.0
        %919 = vmatprep.subr.mxu0 0.0
        %920 = vmatpush1.msra.mxu0 0.0
        %921 = vmatprep.subr.mxu0 0.0
        %922 = vmatpush1.msra.mxu0 0.0
        %923 = vmatprep.subr.mxu0 0.0
        %924 = vmatpush1.msra.mxu0 0.0
        %925 = vmatprep.subr.mxu0 0.0
        %926 = vmatpush1.msra.mxu0 0.0
        %927 = vmatprep.subr.mxu0 0.0
        %928 = vmatpush1.msra.mxu0 0.0
        %929 = vmatprep.subr.mxu0 0.0
        %930 = vmatpush1.msra.mxu0 0.0
        %931 = vmatprep.subr.mxu0 0.0
        %932 = vmatpush1.msra.mxu0 0.0
        %933 = vmatprep.subr.mxu0 0.0
        %934 = vmatpush1.msra.mxu0 0.0
        %935 = vmatprep.subr.mxu0 0.0
        %936 = vmatpush1.msra.mxu0 0.0
        %937 = vmatprep.subr.mxu0 0.0
        %938 = vmatpush1.msra.mxu0 0.0
        %939 = vmatprep.subr.mxu0 0.0
        %940 = vmatpush1.msra.mxu0 0.0
        %941 = vmatprep.subr.mxu0 0.0
        %942 = vmatpush1.msra.mxu0 0.0
        %943 = vmatprep.subr.mxu0 0.0
        %944 = vmatpush1.msra.mxu0 0.0
        %945 = vmatprep.subr.mxu0 0.0
        %946 = vmatpush1.msra.mxu0 0.0
        %947 = vmatprep.subr.mxu0 0.0
        %948 = vmatpush1.msra.mxu0 0.0
        %949 = vmatprep.subr.mxu0 0.0
        %950 = vmatpush1.msra.mxu0 0.0
        %951 = vmatprep.subr.mxu0 0.0
        %952 = vmatpush1.msra.mxu0 0.0
        %953 = vmatprep.subr.mxu0 0.0
        %954 = vmatpush1.msra.mxu0 0.0
        %955 = vmatprep.subr.mxu0 0.0
        %956 = vmatpush1.msra.mxu0 0.0
        %957 = vmatprep.subr.mxu0 0.0
        %958 = vmatpush1.msra.mxu0 0.0
        %959 = vmatprep.subr.mxu0 0.0
        %960 = vmatpush1.msra.mxu0 0.0
        %961 = vmatprep.subr.mxu0 0.0
        %962 = vmatpush1.msra.mxu0 0.0
        %963 = vmatprep.subr.mxu0 0.0
        %964 = vmatpush1.msra.mxu0 0.0
        %965 = vmatprep.subr.mxu0 0.0
        %966 = vmatpush1.msra.mxu0 0.0
        %967 = vmatprep.subr.mxu0 0.0
        %968 = vmatpush1.msra.mxu0 0.0
        %969 = vmatprep.subr.mxu0 0.0
        %970 = vmatpush1.msra.mxu0 0.0
        %971 = vmatprep.subr.mxu0 0.0
        %972 = vmatpush1.msra.mxu0 0.0
        %973 = vmatprep.subr.mxu0 0.0
        %974 = vmatpush1.msra.mxu0 0.0
        %975 = vmatprep.subr.mxu0 0.0
        %976 = vmatpush1.msra.mxu0 0.0
        %977 = vmatprep.subr.mxu0 0.0
        %978 = vmatpush1.msra.mxu0 0.0
        %979 = vmatprep.mubr.f32.mxu0 0.0
        %980 = vmatmul.mubr.f32.gmra.mrb[0].mxu0 %v913
        %v981 = vpop.f32.mrb[0].mxu0
        %v982 = vadd.f32 0.0, %v981
        %v983 = vpop.f32.mrb[0].mxu0
        %984 = vdwg.mxu0
        %986 = vrot.lane.b32.xlu0 %v646, 8
        %v987 = vpop.permute.xlu0 %986
        %990 = vrot.lane.b32.xlu0 %v814, 16
        %v991 = vpop.permute.xlu0 %990
        %994 = vrot.lane.b32.xlu0 %v982, 24
        %v995 = vpop.permute.xlu0 %994
        %v997 = vsel %vm317, %v477, %v987
        %vm998 = vcmask 130048
        %v999 = vsel %vm998, %v997, %v991
        %vm1000 = vcmask 195584
        %v1001 = vsel %vm1000, %v999, %v995
        %vm1002 = vcmask 261120
        %1003 = vst.msk [vmem:[%s306] sm:$0xff] %vm1002, %v1001
        %s1004 = sand.u32 %s130, 1
        %s1005 = scalar_lea.sflag [#allocation4], %s1004
        %s1006 = sand.u32 %s130, 1
        %s1007 = smul.addr %s1006, 8
        %s1008 = scalar_lea.vmem [#allocation8], %s1007
        %s1009 = sand.u32 %s158, 1
        %s1010 = scalar_lea.sflag [#allocation10], %s1009
        %s1011 = sand.u32 %s158, 1
        %s1012 = smul.addr %s1011, 32
        %s1013 = scalar_lea.vmem [#allocation9], %s1012
        // Predicated region
        $region45: #{multi_head_self_attention.8} parent=31 // pred_check
          %p1014 = pneg %p140
        $region46: #{multi_head_self_attention.8} parent=31 // pred_check_branch
          %1016 = sbr.rel (%p1014) target = $region48
        $region47: #{multi_head_self_attention.8} parent=31 // pred_region
          %s1018 = ssub.s32 128, 128
          %1019 = vsyncadd %s1005, %s1018
          %s1020 = sadd.s32 %s33, %s32
          %s1021 = smul.addr %s1020, 128
          %s1022 = scalar_lea.hbm %s3, %s1021
          %s1024 = sshll.u32 %s1008, 4
          %s1025 = int_to_ptr.vmem [resolvable:$true] %s1024
          %1027 = dma.vmem_to_hbm [thread:$0]  %s1025, 128, %s1022, %s1005
        $region48: #{multi_head_self_attention.8} parent=31 // pred_fallthru
          _
        // Predicated region
        $region49: #{multi_head_self_attention.8} parent=31 // pred_check
          %p1028 = pneg %p168
        $region50: #{multi_head_self_attention.8} parent=31 // pred_check_branch
          %1030 = sbr.rel (%p1028) target = $region52
        $region51: #{multi_head_self_attention.8} parent=31 // pred_region
          %s1032 = ssub.s32 512, 512
          %1033 = vsyncadd %s1010, %s1032
          %s1034 = smul.addr %s32, 4
          %s1035 = sadd.s32 %s33, %s1034
          %s1036 = smul.addr %s1035, 128
          %s1037 = scalar_lea.hbm %s4, %s1036
          %s1038 = sshll.u32 %s1013, 4
          %s1039 = int_to_ptr.vmem [resolvable:$true] %s1038
          %1044 = dma.vmem_to_hbm [thread:$0]  %s1039, 512, %s1037, %s1010, 128, 128, 8
        $region52: #{multi_head_self_attention.8} parent=31 // pred_fallthru
          _
      $region32: #{multi_head_self_attention.8} parent=5 // pred_fallthru
        _
      %p1045 = scmp.le.s32.totalorder 2, %s23
      // Predicated region
      $region53: #{multi_head_self_attention.8} parent=5 // pred_check
        %p1046 = pneg %p1045
      $region54: #{multi_head_self_attention.8} parent=5 // pred_check_branch
        %1048 = sbr.rel (%p1046) target = $region56
      $region55: #{multi_head_self_attention.8} parent=5 // pred_region
        %s1049 = ssub.s32 %s23, 2
        // Predicated region
        $region57: #{multi_head_self_attention.8} parent=55 // pred_check
          %p1050 = pneg %p146
        $region58: #{multi_head_self_attention.8} parent=55 // pred_check_branch
          %1052 = sbr.rel (%p1050) target = $region60
        $region59: #{multi_head_self_attention.8} parent=55 // pred_region
          %s1053 = sand.u32 %s131, 1
          %s1054 = scalar_lea.sflag [#allocation4], %s1053
          %s1055 = sand.u32 %s131, 1
          %s1056 = smul.addr %s1055, 8
          %s1057 = scalar_lea.vmem [#allocation8], %s1056
          %1058 = dma.done %s1054, 128
        $region60: #{multi_head_self_attention.8} parent=55 // pred_fallthru
          _
        // Predicated region
        $region61: #{multi_head_self_attention.8} parent=55 // pred_check
          %p1059 = pneg %p174
        $region62: #{multi_head_self_attention.8} parent=55 // pred_check_branch
          %1061 = sbr.rel (%p1059) target = $region64
        $region63: #{multi_head_self_attention.8} parent=55 // pred_region
          %s1062 = sand.u32 %s159, 1
          %s1063 = scalar_lea.sflag [#allocation10], %s1062
          %s1064 = sand.u32 %s159, 1
          %s1065 = smul.addr %s1064, 32
          %s1066 = scalar_lea.vmem [#allocation9], %s1065
          %1067 = dma.done %s1063, 512
        $region64: #{multi_head_self_attention.8} parent=55 // pred_fallthru
          _
      $region56: #{multi_head_self_attention.8} parent=5 // pred_fallthru
        _
    $region6: #{multi_head_self_attention.8} parent=1 // loop_footer
      %s27 = sadd.s32 1, %s23
    $region7: #{multi_head_self_attention.8} parent=1 // loop_footer_branch
      %22 = sbr.rel target = $region3
    $region8: #{multi_head_self_attention.8} parent=1 // loop_exit
      _
    %1068 = vsyncpa [#allocation3], 1
    %s1069 = scalar_lea.sflag [#allocation3], 1
    %1070 = vsyncpa %s1069, 1
    %1071 = vsyncpa [#allocation6], 1
    %s1072 = scalar_lea.sflag [#allocation6], 1
    %1073 = vsyncpa %s1072, 1
    %1074 = vsyncpa [#allocation4], 1
    %s1075 = scalar_lea.sflag [#allocation4], 1
    %1076 = vsyncpa %s1075, 1
    %1077 = vsyncpa [#allocation10], 1
    %s1078 = scalar_lea.sflag [#allocation10], 1
    %1079 = vsyncpa %s1078, 1

</llo_original>
